<compile_context>
chip_gen: v5e
topology: v5e:2x2
jax: 0.10.0
libtpu: 0.0.40
codegen_flags: <defaults>
</compile_context>

<pallas_src>
import jax
import jax.numpy as jnp
import numpy as np
from jax.experimental import pallas as pl
from jax.experimental.pallas import tpu as pltpu

EPS = 1e-5
# Above v5e's 16 MiB scoped default, comfortably below v7x's 64 MiB physical.
_VMEM_LIMIT_BYTES = 48 * 1024 * 1024


# -----------------------------------------------------------------------------
# Fused stride=1 block kernel:
#   out[..., :inp]  = passthrough (even channels; shuffle folded into layout)
#   out[..., inp:]  = relu(bn(1x1)) -> bn(dw kxk, s=1) -> relu(bn(1x1))
# -----------------------------------------------------------------------------
def _make_stride1_kernel(H, W, inp, cmid, cout_main, k):
    pad = k // 2

    def kernel(xp_ref, xm_ref, w1_ref, b1_ref, wdw_ref, w2_ref, b3_ref,
               o_ref, zp_ref):
        # --- branch_main stage 1: 1x1 conv (+ folded BN scale) + bias + ReLU
        xm = xm_ref[0].reshape(H * W, inp)
        y1 = jnp.maximum(
            jnp.dot(xm, w1_ref[...], preferred_element_type=jnp.float32)
            + b1_ref[...], 0.0)                              # (H*W, cmid)

        # --- stage 2: depthwise kxk stride 1 (BN scale folded into weights,
        #     BN bias folded into the next 1x1's bias).  Only the pad border
        #     of the VMEM scratch is re-zeroed; the interior is overwritten.
        if pad > 0:
            zrow = jnp.zeros((pad, W + 2 * pad, cmid), jnp.float32)
            zp_ref[0:pad, :, :] = zrow
            zp_ref[pad + H:, :, :] = zrow
            zcol = jnp.zeros((H, pad, cmid), jnp.float32)
            zp_ref[pad:pad + H, 0:pad, :] = zcol
            zp_ref[pad:pad + H, pad + W:, :] = zcol
        zp_ref[pad:pad + H, pad:pad + W, :] = y1.reshape(H, W, cmid)

        wdw = wdw_ref[...]                                   # (k, k, cmid)
        parts = []
        for kw in range(k):
            # one sublane-shifted column view per kw (k views, not k*k slices)
            col = zp_ref[:, kw:kw + W, :]                    # (H+2p, W, cmid)
            part = col[0:H] * wdw[0, kw]                     # init from 1st tap
            for kh in range(1, k):
                part = part + col[kh:kh + H] * wdw[kh, kw]
            parts.append(part)
        acc = parts[0]
        for p_ in parts[1:]:
            acc = acc + p_                                   # (H, W, cmid)

        # --- stage 3: 1x1 conv (+ folded BN scale, pre-folded dw bias) + ReLU
        y3 = jnp.maximum(
            jnp.dot(acc.reshape(H * W, cmid), w2_ref[...],
                    preferred_element_type=jnp.float32) + b3_ref[...], 0.0)

        # two direct slice stores (no lane-axis concat / output temporary)
        o_ref[:, :, :, :inp] = xp_ref[...]
        o_ref[:, :, :, inp:] = y3.reshape(1, H, W, cout_main)

    return kernel


# -----------------------------------------------------------------------------
# Fused stride=2 block kernel.  The wrapper delivers the input parity-split
# (space-to-depth): x6[ph, i, pw, j, c] = x[2i+ph, 2j+pw, c].  The stride-2
# depthwise then needs only slices of a zero-bordered VMEM scratch, and only
# the strided output positions are ever computed.
#   out[..., :cin]  = branch_proj = bn(dw kxk s=2) -> relu(bn(1x1))
#   out[..., cin:]  = branch_main = relu(bn(1x1)) -> bn(dw s=2) -> relu(bn(1x1))
# -----------------------------------------------------------------------------
def _make_stride2_kernel(H2, W2, cin, cmid, cout_main, k):
    pad = k // 2
    hl = (pad + 1) // 2                  # interior offset inside a parity plane
    tr = pad - hl                        # trailing pad (0 for k=3)

    # tap index -> (parity plane, start offset) along one spatial axis
    taps = []
    for t in range(k):
        d = t - pad
        p = d % 2
        taps.append((p, hl + (d - p) // 2))

    def scatter(z_ref, v6, c):
        # zero only the pad border; the (H2, W2) interior of every parity
        # plane is fully overwritten below (safe across grid steps / cores).
        if hl > 0:
            z_ref[:, :, 0:hl, :, :] = jnp.zeros((2, 2, hl, W2 + pad, c),
                                                jnp.float32)
            z_ref[:, :, hl:hl + H2, 0:hl, :] = jnp.zeros((2, 2, H2, hl, c),
                                                         jnp.float32)
        if tr > 0:
            z_ref[:, :, hl + H2:, :, :] = jnp.zeros((2, 2, tr, W2 + pad, c),
                                                    jnp.float32)
            z_ref[:, :, hl:hl + H2, hl + W2:, :] = jnp.zeros((2, 2, H2, tr, c),
                                                             jnp.float32)
        for ph in range(2):
            for pw in range(2):
                z_ref[ph, pw, hl:hl + H2, hl:hl + W2, :] = v6[ph, :, pw, :, :]

    def depthwise(z_ref, wdw):
        parts = []
        for kw in range(k):
            p_w, ow = taps[kw]
            # one sublane-shifted column view per kw, covering both row-parity
            # planes (k views instead of k*k misaligned slices)
            col = z_ref[:, p_w:p_w + 1, :, ow:ow + W2, :]    # (2,1,H2+p,W2,c)
            p_h0, oh0 = taps[0]
            part = col[p_h0, 0, oh0:oh0 + H2] * wdw[0, kw]   # init from 1st tap
            for kh in range(1, k):
                p_h, oh = taps[kh]
                part = part + col[p_h, 0, oh:oh + H2] * wdw[kh, kw]
            parts.append(part)
        acc = parts[0]
        for p_ in parts[1:]:
            acc = acc + p_
        return acc                                           # (H2, W2, c)

    def kernel(x_ref,
               wpdw_ref, wppw_ref, bp2_ref,
               w1_ref, b1_ref, wdw_ref, w2_ref, b3_ref,
               o_ref, zp_ref, zm_ref):
        x6 = x_ref[0]                                        # (2, H2, 2, W2, cin)

        # -------- branch_proj: dw(k, s=2) -> 1x1 + ReLU (biases folded) ------
        scatter(zp_ref, x6, cin)
        yp = depthwise(zp_ref, wpdw_ref[...])
        yp = jnp.maximum(
            jnp.dot(yp.reshape(H2 * W2, cin), wppw_ref[...],
                    preferred_element_type=jnp.float32) + bp2_ref[...], 0.0)

        # -------- branch_main: 1x1+ReLU -> dw(k, s=2) -> 1x1+ReLU ------------
        y1 = jnp.maximum(
            jnp.dot(x6.reshape(4 * H2 * W2, cin), w1_ref[...],
                    preferred_element_type=jnp.float32) + b1_ref[...], 0.0)
        scatter(zm_ref, y1.reshape(2, H2, 2, W2, cmid), cmid)
        y2 = depthwise(zm_ref, wdw_ref[...])
        y3 = jnp.maximum(
            jnp.dot(y2.reshape(H2 * W2, cmid), w2_ref[...],
                    preferred_element_type=jnp.float32) + b3_ref[...], 0.0)

        # two direct slice stores (no lane-axis concat)
        o_ref[:, :, :, :cin] = yp.reshape(1, H2, W2, cin)
        o_ref[:, :, :, cin:] = y3.reshape(1, H2, W2, cout_main)

    return kernel


# -----------------------------------------------------------------------------
# Trace-time parameter folding (BN scale into conv weights, dw-bias into the
# next 1x1's bias)
# -----------------------------------------------------------------------------
def _fold_bn(gamma, beta, mean, var):
    scale = gamma / jnp.sqrt(var + EPS)
    return scale, beta - mean * scale


def _folded_pointwise(w_conv, bn):
    """torch (Cout,Cin,1,1) conv + BN -> (Cin,Cout) matmul weight, (1,Cout) bias."""
    s, b = _fold_bn(**bn)
    return w_conv[:, :, 0, 0].T * s[None, :], b.reshape(1, -1)


def _folded_depthwise(w_conv, bn):
    """torch (C,1,k,k) depthwise conv + BN -> (k,k,C) weight, (1,C) bias."""
    s, b = _fold_bn(**bn)
    return jnp.transpose(w_conv[:, 0, :, :], (1, 2, 0)) * s, b.reshape(1, -1)


# -----------------------------------------------------------------------------
# Wrappers (NCHW in / NCHW out).  The boundary transposes also absorb the
# channel shuffle (stride=1) and the stride-2 parity de-interleave.
# -----------------------------------------------------------------------------
def _block_stride1(x_nchw, params, *, in_planes, out_planes, mid_channels,
                   kernel_size):
    B, C, H, W = x_nchw.shape
    assert C == 2 * in_planes
    k = kernel_size
    pad = k // 2
    cout_main = out_planes - in_planes
    # NOTE: keep W a multiple of 8 so in-kernel (H,W,C)<->(H*W,C) reshapes stay
    # layout-compatible (no hidden relayout copies).

    # channel shuffle folded into the NCHW -> channels-last transpose; even and
    # odd halves delivered as two separate, lane-aligned kernel inputs.
    x5 = jnp.transpose(x_nchw.reshape(B, in_planes, 2, H, W), (0, 3, 4, 2, 1))
    x_proj = x5[:, :, :, 0, :]          # even channels (passthrough)
    x_main = x5[:, :, :, 1, :]          # odd channels (branch_main)

    w1, b1 = _folded_pointwise(params['main_pw1_w'], params['main_bn1'])
    wdw, b2 = _folded_depthwise(params['main_dw_w'], params['main_bn2'])
    w2, b3 = _folded_pointwise(params['main_pw2_w'], params['main_bn3'])
    b3 = b3 + jnp.dot(b2, w2)           # fold post-depthwise bias (exact)

    kern = _make_stride1_kernel(H, W, in_planes, mid_channels, cout_main, k)
    out = pl.pallas_call(
        kern,
        out_shape=jax.ShapeDtypeStruct((B, H, W, out_planes), jnp.float32),
        grid_spec=pltpu.PrefetchScalarGridSpec(
            num_scalar_prefetch=0,
            grid=(B,),
            in_specs=[
                pl.BlockSpec((1, H, W, in_planes), lambda b: (b, 0, 0, 0)),
                pl.BlockSpec((1, H, W, in_planes), lambda b: (b, 0, 0, 0)),
                pl.BlockSpec((in_planes, mid_channels), lambda b: (0, 0)),
                pl.BlockSpec((1, mid_channels), lambda b: (0, 0)),
                pl.BlockSpec((k, k, mid_channels), lambda b: (0, 0, 0)),
                pl.BlockSpec((mid_channels, cout_main), lambda b: (0, 0)),
                pl.BlockSpec((1, cout_main), lambda b: (0, 0)),
            ],
            out_specs=pl.BlockSpec((1, H, W, out_planes), lambda b: (b, 0, 0, 0)),
            scratch_shapes=[
                pltpu.VMEM((H + 2 * pad, W + 2 * pad, mid_channels), jnp.float32),
            ],
        ),
        compiler_params=pltpu.CompilerParams(
            dimension_semantics=("parallel",),
            vmem_limit_bytes=_VMEM_LIMIT_BYTES),
    )(x_proj, x_main, w1, b1, wdw, w2, b3)

    return jnp.transpose(out, (0, 3, 1, 2))


def _block_stride2(x_nchw, params, *, in_planes, out_planes, mid_channels,
                   kernel_size):
    B, C, H, W = x_nchw.shape
    assert C == in_planes
    assert H % 2 == 0 and W % 2 == 0
    k = kernel_size
    pad = k // 2
    H2, W2 = H // 2, W // 2
    cout_main = out_planes - in_planes

    # space-to-depth folded into the boundary transpose:
    #   x_de[b, ph, i, pw, j, c] = x[b, c, 2i+ph, 2j+pw]
    x_de = jnp.transpose(x_nchw.reshape(B, C, H2, 2, W2, 2), (0, 3, 2, 5, 4, 1))

    wpdw, bp1 = _folded_depthwise(params['proj_dw_w'], params['proj_bn1'])
    wppw, bp2 = _folded_pointwise(params['proj_pw_w'], params['proj_bn2'])
    bp2 = bp2 + jnp.dot(bp1, wppw)      # fold post-depthwise bias (exact)
    w1, b1 = _folded_pointwise(params['main_pw1_w'], params['main_bn1'])
    wdw, b2 = _folded_depthwise(params['main_dw_w'], params['main_bn2'])
    w2, b3 = _folded_pointwise(params['main_pw2_w'], params['main_bn3'])
    b3 = b3 + jnp.dot(b2, w2)           # fold post-depthwise bias (exact)

    kern = _make_stride2_kernel(H2, W2, in_planes, mid_channels, cout_main, k)
    out = pl.pallas_call(
        kern,
        out_shape=jax.ShapeDtypeStruct((B, H2, W2, out_planes), jnp.float32),
        grid_spec=pltpu.PrefetchScalarGridSpec(
            num_scalar_prefetch=0,
            grid=(B,),
            in_specs=[
                pl.BlockSpec((1, 2, H2, 2, W2, in_planes),
                             lambda b: (b, 0, 0, 0, 0, 0)),
                pl.BlockSpec((k, k, in_planes), lambda b: (0, 0, 0)),
                pl.BlockSpec((in_planes, in_planes), lambda b: (0, 0)),
                pl.BlockSpec((1, in_planes), lambda b: (0, 0)),
                pl.BlockSpec((in_planes, mid_channels), lambda b: (0, 0)),
                pl.BlockSpec((1, mid_channels), lambda b: (0, 0)),
                pl.BlockSpec((k, k, mid_channels), lambda b: (0, 0, 0)),
                pl.BlockSpec((mid_channels, cout_main), lambda b: (0, 0)),
                pl.BlockSpec((1, cout_main), lambda b: (0, 0)),
            ],
            out_specs=pl.BlockSpec((1, H2, W2, out_planes), lambda b: (b, 0, 0, 0)),
            scratch_shapes=[
                pltpu.VMEM((2, 2, H2 + pad, W2 + pad, in_planes), jnp.float32),
                pltpu.VMEM((2, 2, H2 + pad, W2 + pad, mid_channels), jnp.float32),
            ],
        ),
        compiler_params=pltpu.CompilerParams(
            dimension_semantics=("parallel",),
            vmem_limit_bytes=_VMEM_LIMIT_BYTES),
    )(x_de, wpdw, wppw, bp2, w1, b1, wdw, w2, b3)

    return jnp.transpose(out, (0, 3, 1, 2))


def shuffle_v2_block(x_nchw, params, *, in_planes, out_planes, mid_channels,
                     kernel_size, stride):
    assert stride in (1, 2)
    if stride == 1:
        return _block_stride1(x_nchw, params, in_planes=in_planes,
                              out_planes=out_planes, mid_channels=mid_channels,
                              kernel_size=kernel_size)
    return _block_stride2(x_nchw, params, in_planes=in_planes,
                          out_planes=out_planes, mid_channels=mid_channels,
                          kernel_size=kernel_size)


# -----------------------------------------------------------------------------
# Parameter init (deterministic, synthetic) — same as the PyTorch module layout
# -----------------------------------------------------------------------------
def init_params(key, in_planes, out_planes, mid_channels, kernel_size, stride):
    outputs = out_planes - in_planes
    keys = iter(jax.random.split(key, 32))

    def conv_w(cout, cin, kh, kw):
        return 0.1 * jax.random.normal(next(keys), (cout, cin, kh, kw), jnp.float32)

    def bn(c):
        return dict(
            gamma=1.0 + 0.1 * jax.random.normal(next(keys), (c,), jnp.float32),
            beta=0.1 * jax.random.normal(next(keys), (c,), jnp.float32),
            mean=0.1 * jax.random.normal(next(keys), (c,), jnp.float32),
            var=jax.random.uniform(next(keys), (c,), jnp.float32, 0.5, 1.5),
        )

    p = dict(
        main_pw1_w=conv_w(mid_channels, in_planes, 1, 1),
        main_bn1=bn(mid_channels),
        main_dw_w=conv_w(mid_channels, 1, kernel_size, kernel_size),
        main_bn2=bn(mid_channels),
        main_pw2_w=conv_w(outputs, mid_channels, 1, 1),
        main_bn3=bn(outputs),
    )
    if stride == 2:
        p.update(
            proj_dw_w=conv_w(in_planes, 1, kernel_size, kernel_size),
            proj_bn1=bn(in_planes),
            proj_pw_w=conv_w(in_planes, in_planes, 1, 1),
            proj_bn2=bn(in_planes),
        )
    return p


# -----------------------------------------------------------------------------
# Pure-JAX reference (matches the PyTorch module) for a correctness check
# -----------------------------------------------------------------------------
def _bn_ref(y, bn):
    s = bn['gamma'] / jnp.sqrt(bn['var'] + EPS)
    b = bn['beta'] - bn['mean'] * s
    return y * s[None, :, None, None] + b[None, :, None, None]


def _conv_ref(x, w, *, stride=1, groups=1):
    pad = w.shape[2] // 2
    return jax.lax.conv_general_dilated(
        x, w, window_strides=(stride, stride),
        padding=[(pad, pad), (pad, pad)],
        dimension_numbers=('NCHW', 'OIHW', 'NCHW'),
        feature_group_count=groups)


def shuffle_v2_block_ref(x, params, *, stride):
    def branch_main(z):
        z = jax.nn.relu(_bn_ref(_conv_ref(z, params['main_pw1_w']),
                                params['main_bn1']))
        z = _bn_ref(_conv_ref(z, params['main_dw_w'], stride=stride,
                              groups=z.shape[1]), params['main_bn2'])
        z = jax.nn.relu(_bn_ref(_conv_ref(z, params['main_pw2_w']),
                                params['main_bn3']))
        return z

    if stride == 1:
        x_proj, x_main = x[:, 0::2], x[:, 1::2]
        return jnp.concatenate([x_proj, branch_main(x_main)], axis=1)

    def branch_proj(z):
        z = _bn_ref(_conv_ref(z, params['proj_dw_w'], stride=stride,
                              groups=z.shape[1]), params['proj_bn1'])
        z = jax.nn.relu(_bn_ref(_conv_ref(z, params['proj_pw_w']),
                                params['proj_bn2']))
        return z

    return jnp.concatenate([branch_proj(x), branch_main(x)], axis=1)


if __name__ == "__main__":
    key = jax.random.PRNGKey(0)
    k_x1, k_p1, k_x2, k_p2 = jax.random.split(key, 4)

    # Tolerance tightened 5x vs the previous revision (was 5e-2).  Kept at 1e-2
    # rather than 1e-4 because both the in-kernel MXU dots and the XLA reference
    # convs run at default (reduced) f32 matmul precision with different
    # accumulation orders; the bias folding itself is exact.
    RTOL = ATOL = 1e-2

    # stride=1 block: input has 2*in_planes channels (channel shuffle splits them)
    in_planes, out_planes, mid = 8, 16, 8
    x1 = jax.random.normal(k_x1, (2, 2 * in_planes, 16, 16), jnp.float32)
    p1 = init_params(k_p1, in_planes, out_planes, mid, 3, 1)
    y1 = shuffle_v2_block(x1, p1, in_planes=in_planes, out_planes=out_planes,
                          mid_channels=mid, kernel_size=3, stride=1)
    jax.block_until_ready(y1)
    assert y1.shape == (2, out_planes, 16, 16), y1.shape
    r1 = shuffle_v2_block_ref(x1, p1, stride=1)
    np.testing.assert_allclose(np.asarray(y1), np.asarray(r1), rtol=RTOL, atol=ATOL)

    # stride=2 block: spatial downsample, branch_proj active
    in_planes2, out_planes2, mid2 = 16, 32, 16
    x2 = jax.random.normal(k_x2, (2, in_planes2, 16, 16), jnp.float32)
    p2 = init_params(k_p2, in_planes2, out_planes2, mid2, 3, 2)
    y2 = shuffle_v2_block(x2, p2, in_planes=in_planes2, out_planes=out_planes2,
                          mid_channels=mid2, kernel_size=3, stride=2)
    jax.block_until_ready(y2)
    assert y2.shape == (2, out_planes2, 8, 8), y2.shape
    r2 = shuffle_v2_block_ref(x2, p2, stride=2)
    np.testing.assert_allclose(np.asarray(y2), np.asarray(r2), rtol=RTOL, atol=ATOL)

    print("KERNEL_OK")
</pallas_src>

<mosaic_0001>
module attributes {stable_mosaic.version = 11 : i64} {
  func.func @kernel(%arg0: i32, %arg1: memref<1x16x16x8xf32, #tpu.memory_space<vmem>>, %arg2: memref<1x16x16x8xf32, #tpu.memory_space<vmem>>, %arg3: memref<8x8xf32, #tpu.memory_space<vmem>>, %arg4: memref<1x8xf32, #tpu.memory_space<vmem>>, %arg5: memref<3x3x8xf32, #tpu.memory_space<vmem>>, %arg6: memref<8x8xf32, #tpu.memory_space<vmem>>, %arg7: memref<1x8xf32, #tpu.memory_space<vmem>>, %arg8: memref<1x16x16x16xf32, #tpu.memory_space<vmem>>, %arg9: memref<18x18x8xf32, #tpu.memory_space<vmem>>) attributes {dimension_semantics = [#tpu.dimension_semantics<parallel>], iteration_bounds = array<i64: 2>, scalar_prefetch = 0 : i64, scratch_operands = 1 : i64, tpu.core_type = #tpu.core_type<tc>, window_params = [{transform_indices = @transform_0, window_bounds = array<i64: 1, 16, 16, 8>}, {transform_indices = @transform_1, window_bounds = array<i64: 1, 16, 16, 8>}, {pipeline_mode = #tpu.pipeline_mode<synchronous>, transform_indices = @transform_2, window_bounds = array<i64: 8, 8>}, {pipeline_mode = #tpu.pipeline_mode<synchronous>, transform_indices = @transform_3, window_bounds = array<i64: 1, 8>}, {pipeline_mode = #tpu.pipeline_mode<synchronous>, transform_indices = @transform_4, window_bounds = array<i64: 3, 3, 8>}, {pipeline_mode = #tpu.pipeline_mode<synchronous>, transform_indices = @transform_5, window_bounds = array<i64: 8, 8>}, {pipeline_mode = #tpu.pipeline_mode<synchronous>, transform_indices = @transform_6, window_bounds = array<i64: 1, 8>}, {transform_indices = @transform_7, window_bounds = array<i64: 1, 16, 16, 16>}]} {
    %c0 = arith.constant 0 : index
    %c0_0 = arith.constant 0 : index
    %c0_1 = arith.constant 0 : index
    %c0_2 = arith.constant 0 : index
    %0 = vector.load %arg2[%c0, %c0_0, %c0_1, %c0_2] : memref<1x16x16x8xf32, #tpu.memory_space<vmem>>, vector<1x16x16x8xf32>
    %1 = vector.shape_cast %0 : vector<1x16x16x8xf32> to vector<16x16x8xf32>
    %2 = vector.shape_cast %1 : vector<16x16x8xf32> to vector<256x8xf32>
    %c0_3 = arith.constant 0 : index
    %c0_4 = arith.constant 0 : index
    %3 = vector.load %arg3[%c0_3, %c0_4] : memref<8x8xf32, #tpu.memory_space<vmem>>, vector<8x8xf32>
    %cst = arith.constant dense<0.000000e+00> : vector<256x8xf32>
    %4 = tpu.matmul %2, %3, %cst {dimension_numbers = #tpu.dot_dimension_numbers<[1], [0], [0], [1], [0, 0, 1, 1], [], []>} : vector<256x8xf32>, vector<8x8xf32>, vector<256x8xf32> -> vector<256x8xf32>
    %c0_5 = arith.constant 0 : index
    %c0_6 = arith.constant 0 : index
    %5 = vector.load %arg4[%c0_5, %c0_6] : memref<1x8xf32, #tpu.memory_space<vmem>>, vector<1x8xf32>
    %6 = vector.broadcast %5 : vector<1x8xf32> to vector<256x8xf32>
    %7 = arith.addf %4, %6 : vector<256x8xf32>
    %cst_7 = arith.constant 0.000000e+00 : f32
    %8 = vector.broadcast %cst_7 : f32 to vector<256x8xf32>
    %9 = arith.maximumf %7, %8 : vector<256x8xf32>
    %cst_8 = arith.constant 0.000000e+00 : f32
    %10 = vector.broadcast %cst_8 : f32 to vector<1x18x8xf32>
    %c0_9 = arith.constant 0 : index
    %c0_10 = arith.constant 0 : index
    %c0_11 = arith.constant 0 : index
    %11 = vector.load %arg9[%c0_9, %c0_10, %c0_11] : memref<18x18x8xf32, #tpu.memory_space<vmem>>, vector<1x18x8xf32>
    tpu.vector_store %arg9[%c0_9, %c0_10, %c0_11], %10 {strides = array<i32>} : memref<18x18x8xf32, #tpu.memory_space<vmem>>, vector<1x18x8xf32>,
    %c17 = arith.constant 17 : index
    %c0_12 = arith.constant 0 : index
    %c0_13 = arith.constant 0 : index
    %12 = vector.load %arg9[%c17, %c0_12, %c0_13] : memref<18x18x8xf32, #tpu.memory_space<vmem>>, vector<1x18x8xf32>
    tpu.vector_store %arg9[%c17, %c0_12, %c0_13], %10 {strides = array<i32>} : memref<18x18x8xf32, #tpu.memory_space<vmem>>, vector<1x18x8xf32>,
    %cst_14 = arith.constant 0.000000e+00 : f32
    %13 = vector.broadcast %cst_14 : f32 to vector<16x1x8xf32>
    %c1 = arith.constant 1 : index
    %c0_15 = arith.constant 0 : index
    %c0_16 = arith.constant 0 : index
    %14 = vector.load %arg9[%c1, %c0_15, %c0_16] : memref<18x18x8xf32, #tpu.memory_space<vmem>>, vector<16x1x8xf32>
    tpu.vector_store %arg9[%c1, %c0_15, %c0_16], %13 {strides = array<i32>} : memref<18x18x8xf32, #tpu.memory_space<vmem>>, vector<16x1x8xf32>,
    %c1_17 = arith.constant 1 : index
    %c17_18 = arith.constant 17 : index
    %c0_19 = arith.constant 0 : index
    %15 = vector.load %arg9[%c1_17, %c17_18, %c0_19] : memref<18x18x8xf32, #tpu.memory_space<vmem>>, vector<16x1x8xf32>
    tpu.vector_store %arg9[%c1_17, %c17_18, %c0_19], %13 {strides = array<i32>} : memref<18x18x8xf32, #tpu.memory_space<vmem>>, vector<16x1x8xf32>,
    %16 = vector.shape_cast %9 : vector<256x8xf32> to vector<16x16x8xf32>
    %c1_20 = arith.constant 1 : index
    %c1_21 = arith.constant 1 : index
    %c0_22 = arith.constant 0 : index
    %17 = vector.load %arg9[%c1_20, %c1_21, %c0_22] : memref<18x18x8xf32, #tpu.memory_space<vmem>>, vector<16x16x8xf32>
    tpu.vector_store %arg9[%c1_20, %c1_21, %c0_22], %16 {strides = array<i32>} : memref<18x18x8xf32, #tpu.memory_space<vmem>>, vector<16x16x8xf32>,
    %c0_23 = arith.constant 0 : index
    %c0_24 = arith.constant 0 : index
    %c0_25 = arith.constant 0 : index
    %18 = vector.load %arg5[%c0_23, %c0_24, %c0_25] : memref<3x3x8xf32, #tpu.memory_space<vmem>>, vector<3x3x8xf32>
    %c0_26 = arith.constant 0 : index
    %c0_27 = arith.constant 0 : index
    %c0_28 = arith.constant 0 : index
    %19 = vector.load %arg9[%c0_26, %c0_27, %c0_28] : memref<18x18x8xf32, #tpu.memory_space<vmem>>, vector<18x16x8xf32>
    %20 = vector.extract_strided_slice %19 {offsets = [0, 0, 0], sizes = [16, 16, 8], strides = [1, 1, 1]} : vector<18x16x8xf32> to vector<16x16x8xf32>
    %21 = vector.extract_strided_slice %18 {offsets = [0, 0, 0], sizes = [1, 1, 8], strides = [1, 1, 1]} : vector<3x3x8xf32> to vector<1x1x8xf32>
    %22 = vector.shape_cast %21 : vector<1x1x8xf32> to vector<8xf32>
    %23 = vector.shape_cast %22 : vector<8xf32> to vector<1x1x8xf32>
    %24 = vector.broadcast %23 : vector<1x1x8xf32> to vector<16x16x8xf32>
    %25 = arith.mulf %20, %24 : vector<16x16x8xf32>
    %26 = vector.extract_strided_slice %19 {offsets = [1, 0, 0], sizes = [16, 16, 8], strides = [1, 1, 1]} : vector<18x16x8xf32> to vector<16x16x8xf32>
    %27 = vector.extract_strided_slice %18 {offsets = [1, 0, 0], sizes = [1, 1, 8], strides = [1, 1, 1]} : vector<3x3x8xf32> to vector<1x1x8xf32>
    %28 = vector.shape_cast %27 : vector<1x1x8xf32> to vector<8xf32>
    %29 = vector.shape_cast %28 : vector<8xf32> to vector<1x1x8xf32>
    %30 = vector.broadcast %29 : vector<1x1x8xf32> to vector<16x16x8xf32>
    %31 = arith.mulf %26, %30 : vector<16x16x8xf32>
    %32 = arith.addf %25, %31 : vector<16x16x8xf32>
    %33 = vector.extract_strided_slice %19 {offsets = [2, 0, 0], sizes = [16, 16, 8], strides = [1, 1, 1]} : vector<18x16x8xf32> to vector<16x16x8xf32>
    %34 = vector.extract_strided_slice %18 {offsets = [2, 0, 0], sizes = [1, 1, 8], strides = [1, 1, 1]} : vector<3x3x8xf32> to vector<1x1x8xf32>
    %35 = vector.shape_cast %34 : vector<1x1x8xf32> to vector<8xf32>
    %36 = vector.shape_cast %35 : vector<8xf32> to vector<1x1x8xf32>
    %37 = vector.broadcast %36 : vector<1x1x8xf32> to vector<16x16x8xf32>
    %38 = arith.mulf %33, %37 : vector<16x16x8xf32>
    %39 = arith.addf %32, %38 : vector<16x16x8xf32>
    %c0_29 = arith.constant 0 : index
    %c1_30 = arith.constant 1 : index
    %c0_31 = arith.constant 0 : index
    %40 = vector.load %arg9[%c0_29, %c1_30, %c0_31] : memref<18x18x8xf32, #tpu.memory_space<vmem>>, vector<18x16x8xf32>
    %41 = vector.extract_strided_slice %40 {offsets = [0, 0, 0], sizes = [16, 16, 8], strides = [1, 1, 1]} : vector<18x16x8xf32> to vector<16x16x8xf32>
    %42 = vector.extract_strided_slice %18 {offsets = [0, 1, 0], sizes = [1, 1, 8], strides = [1, 1, 1]} : vector<3x3x8xf32> to vector<1x1x8xf32>
    %43 = vector.shape_cast %42 : vector<1x1x8xf32> to vector<8xf32>
    %44 = vector.shape_cast %43 : vector<8xf32> to vector<1x1x8xf32>
    %45 = vector.broadcast %44 : vector<1x1x8xf32> to vector<16x16x8xf32>
    %46 = arith.mulf %41, %45 : vector<16x16x8xf32>
    %47 = vector.extract_strided_slice %40 {offsets = [1, 0, 0], sizes = [16, 16, 8], strides = [1, 1, 1]} : vector<18x16x8xf32> to vector<16x16x8xf32>
    %48 = vector.extract_strided_slice %18 {offsets = [1, 1, 0], sizes = [1, 1, 8], strides = [1, 1, 1]} : vector<3x3x8xf32> to vector<1x1x8xf32>
    %49 = vector.shape_cast %48 : vector<1x1x8xf32> to vector<8xf32>
    %50 = vector.shape_cast %49 : vector<8xf32> to vector<1x1x8xf32>
    %51 = vector.broadcast %50 : vector<1x1x8xf32> to vector<16x16x8xf32>
    %52 = arith.mulf %47, %51 : vector<16x16x8xf32>
    %53 = arith.addf %46, %52 : vector<16x16x8xf32>
    %54 = vector.extract_strided_slice %40 {offsets = [2, 0, 0], sizes = [16, 16, 8], strides = [1, 1, 1]} : vector<18x16x8xf32> to vector<16x16x8xf32>
    %55 = vector.extract_strided_slice %18 {offsets = [2, 1, 0], sizes = [1, 1, 8], strides = [1, 1, 1]} : vector<3x3x8xf32> to vector<1x1x8xf32>
    %56 = vector.shape_cast %55 : vector<1x1x8xf32> to vector<8xf32>
    %57 = vector.shape_cast %56 : vector<8xf32> to vector<1x1x8xf32>
    %58 = vector.broadcast %57 : vector<1x1x8xf32> to vector<16x16x8xf32>
    %59 = arith.mulf %54, %58 : vector<16x16x8xf32>
    %60 = arith.addf %53, %59 : vector<16x16x8xf32>
    %c0_32 = arith.constant 0 : index
    %c2 = arith.constant 2 : index
    %c0_33 = arith.constant 0 : index
    %61 = vector.load %arg9[%c0_32, %c2, %c0_33] : memref<18x18x8xf32, #tpu.memory_space<vmem>>, vector<18x16x8xf32>
    %62 = vector.extract_strided_slice %61 {offsets = [0, 0, 0], sizes = [16, 16, 8], strides = [1, 1, 1]} : vector<18x16x8xf32> to vector<16x16x8xf32>
    %63 = vector.extract_strided_slice %18 {offsets = [0, 2, 0], sizes = [1, 1, 8], strides = [1, 1, 1]} : vector<3x3x8xf32> to vector<1x1x8xf32>
    %64 = vector.shape_cast %63 : vector<1x1x8xf32> to vector<8xf32>
    %65 = vector.shape_cast %64 : vector<8xf32> to vector<1x1x8xf32>
    %66 = vector.broadcast %65 : vector<1x1x8xf32> to vector<16x16x8xf32>
    %67 = arith.mulf %62, %66 : vector<16x16x8xf32>
    %68 = vector.extract_strided_slice %61 {offsets = [1, 0, 0], sizes = [16, 16, 8], strides = [1, 1, 1]} : vector<18x16x8xf32> to vector<16x16x8xf32>
    %69 = vector.extract_strided_slice %18 {offsets = [1, 2, 0], sizes = [1, 1, 8], strides = [1, 1, 1]} : vector<3x3x8xf32> to vector<1x1x8xf32>
    %70 = vector.shape_cast %69 : vector<1x1x8xf32> to vector<8xf32>
    %71 = vector.shape_cast %70 : vector<8xf32> to vector<1x1x8xf32>
    %72 = vector.broadcast %71 : vector<1x1x8xf32> to vector<16x16x8xf32>
    %73 = arith.mulf %68, %72 : vector<16x16x8xf32>
    %74 = arith.addf %67, %73 : vector<16x16x8xf32>
    %75 = vector.extract_strided_slice %61 {offsets = [2, 0, 0], sizes = [16, 16, 8], strides = [1, 1, 1]} : vector<18x16x8xf32> to vector<16x16x8xf32>
    %76 = vector.extract_strided_slice %18 {offsets = [2, 2, 0], sizes = [1, 1, 8], strides = [1, 1, 1]} : vector<3x3x8xf32> to vector<1x1x8xf32>
    %77 = vector.shape_cast %76 : vector<1x1x8xf32> to vector<8xf32>
    %78 = vector.shape_cast %77 : vector<8xf32> to vector<1x1x8xf32>
    %79 = vector.broadcast %78 : vector<1x1x8xf32> to vector<16x16x8xf32>
    %80 = arith.mulf %75, %79 : vector<16x16x8xf32>
    %81 = arith.addf %74, %80 : vector<16x16x8xf32>
    %82 = arith.addf %39, %60 : vector<16x16x8xf32>
    %83 = arith.addf %82, %81 : vector<16x16x8xf32>
    %84 = vector.shape_cast %83 : vector<16x16x8xf32> to vector<256x8xf32>
    %c0_34 = arith.constant 0 : index
    %c0_35 = arith.constant 0 : index
    %85 = vector.load %arg6[%c0_34, %c0_35] : memref<8x8xf32, #tpu.memory_space<vmem>>, vector<8x8xf32>
    %cst_36 = arith.constant dense<0.000000e+00> : vector<256x8xf32>
    %86 = tpu.matmul %84, %85, %cst_36 {dimension_numbers = #tpu.dot_dimension_numbers<[1], [0], [0], [1], [0, 0, 1, 1], [], []>} : vector<256x8xf32>, vector<8x8xf32>, vector<256x8xf32> -> vector<256x8xf32>
    %c0_37 = arith.constant 0 : index
    %c0_38 = arith.constant 0 : index
    %87 = vector.load %arg7[%c0_37, %c0_38] : memref<1x8xf32, #tpu.memory_space<vmem>>, vector<1x8xf32>
    %88 = vector.broadcast %87 : vector<1x8xf32> to vector<256x8xf32>
    %89 = arith.addf %86, %88 : vector<256x8xf32>
    %cst_39 = arith.constant 0.000000e+00 : f32
    %90 = vector.broadcast %cst_39 : f32 to vector<256x8xf32>
    %91 = arith.maximumf %89, %90 : vector<256x8xf32>
    %c0_40 = arith.constant 0 : index
    %c0_41 = arith.constant 0 : index
    %c0_42 = arith.constant 0 : index
    %c0_43 = arith.constant 0 : index
    %92 = vector.load %arg1[%c0_40, %c0_41, %c0_42, %c0_43] : memref<1x16x16x8xf32, #tpu.memory_space<vmem>>, vector<1x16x16x8xf32>
    %c0_44 = arith.constant 0 : index
    %c0_45 = arith.constant 0 : index
    %c0_46 = arith.constant 0 : index
    %c0_47 = arith.constant 0 : index
    %93 = vector.load %arg8[%c0_44, %c0_45, %c0_46, %c0_47] : memref<1x16x16x16xf32, #tpu.memory_space<vmem>>, vector<1x16x16x8xf32>
    tpu.vector_store %arg8[%c0_44, %c0_45, %c0_46, %c0_47], %92 {strides = array<i32>} : memref<1x16x16x16xf32, #tpu.memory_space<vmem>>, vector<1x16x16x8xf32>,
    %94 = vector.shape_cast %91 : vector<256x8xf32> to vector<1x16x16x8xf32>
    %c0_48 = arith.constant 0 : index
    %c0_49 = arith.constant 0 : index
    %c0_50 = arith.constant 0 : index
    %c8 = arith.constant 8 : index
    %95 = vector.load %arg8[%c0_48, %c0_49, %c0_50, %c8] : memref<1x16x16x16xf32, #tpu.memory_space<vmem>>, vector<1x16x16x8xf32>
    tpu.vector_store %arg8[%c0_48, %c0_49, %c0_50, %c8], %94 {strides = array<i32>} : memref<1x16x16x16xf32, #tpu.memory_space<vmem>>, vector<1x16x16x8xf32>,
    return
  }
  func.func @transform_0(%arg0: i32) -> (i32, i32, i32, i32) {
    %c0_i32 = arith.constant 0 : i32
    %c0_i32_0 = arith.constant 0 : i32
    %c0_i32_1 = arith.constant 0 : i32
    %c0_i32_2 = arith.constant 0 : i32
    return %arg0, %c0_i32, %c0_i32_0, %c0_i32_1 : i32, i32, i32, i32
  }
  func.func @transform_1(%arg0: i32) -> (i32, i32, i32, i32) {
    %c0_i32 = arith.constant 0 : i32
    %c0_i32_0 = arith.constant 0 : i32
    %c0_i32_1 = arith.constant 0 : i32
    %c0_i32_2 = arith.constant 0 : i32
    return %arg0, %c0_i32, %c0_i32_0, %c0_i32_1 : i32, i32, i32, i32
  }
  func.func @transform_2(%arg0: i32) -> (i32, i32) {
    %c0_i32 = arith.constant 0 : i32
    %c0_i32_0 = arith.constant 0 : i32
    %c0_i32_1 = arith.constant 0 : i32
    return %c0_i32, %c0_i32_0 : i32, i32
  }
  func.func @transform_3(%arg0: i32) -> (i32, i32) {
    %c0_i32 = arith.constant 0 : i32
    %c0_i32_0 = arith.constant 0 : i32
    %c0_i32_1 = arith.constant 0 : i32
    return %c0_i32, %c0_i32_0 : i32, i32
  }
  func.func @transform_4(%arg0: i32) -> (i32, i32, i32) {
    %c0_i32 = arith.constant 0 : i32
    %c0_i32_0 = arith.constant 0 : i32
    %c0_i32_1 = arith.constant 0 : i32
    %c0_i32_2 = arith.constant 0 : i32
    return %c0_i32, %c0_i32_0, %c0_i32_1 : i32, i32, i32
  }
  func.func @transform_5(%arg0: i32) -> (i32, i32) {
    %c0_i32 = arith.constant 0 : i32
    %c0_i32_0 = arith.constant 0 : i32
    %c0_i32_1 = arith.constant 0 : i32
    return %c0_i32, %c0_i32_0 : i32, i32
  }
  func.func @transform_6(%arg0: i32) -> (i32, i32) {
    %c0_i32 = arith.constant 0 : i32
    %c0_i32_0 = arith.constant 0 : i32
    %c0_i32_1 = arith.constant 0 : i32
    return %c0_i32, %c0_i32_0 : i32, i32
  }
  func.func @transform_7(%arg0: i32) -> (i32, i32, i32, i32) {
    %c0_i32 = arith.constant 0 : i32
    %c0_i32_0 = arith.constant 0 : i32
    %c0_i32_1 = arith.constant 0 : i32
    %c0_i32_2 = arith.constant 0 : i32
    return %arg0, %c0_i32, %c0_i32_0, %c0_i32_1 : i32, i32, i32, i32
  }
}

</mosaic_0001>

<llo_original>
// kernel: tpu_custom_call.1
$region0: #{tpu_custom_call.1}
  #allocation0 [shape = 'u32[]', space=smem, size = 0x4, offset = 0x4, fixed_abs, tag = 'smem constant byte address 0x4 - core index']
  #allocation1 [shape = 'u32[72,128]{1,0:T(1,128)}', space=vmem, size = 0x9000, scoped, tag = 'internal scratch']
  #allocation2 [shape = 'f32[18,18,8]{2,1,0:T(8,128)}', space=vmem, size = 0x36000, scoped, tag = 'scratch operand']
  %s0 = inlined_call_operand.vmem [shape: f32[2,16,16,8], index: 0, kind: input, shape index: {}]
  %s1 = inlined_call_operand.vmem [shape: f32[2,16,16,8], index: 1, kind: input, shape index: {}]
  %s2 = inlined_call_operand.vmem [shape: f32[8,8], index: 2, kind: input, shape index: {}]
  %s3 = inlined_call_operand.vmem [shape: f32[1,8], index: 3, kind: input, shape index: {}]
  %s4 = inlined_call_operand.vmem [shape: f32[3,3,8], index: 4, kind: input, shape index: {}]
  %s5 = inlined_call_operand.vmem [shape: f32[8,8], index: 5, kind: input, shape index: {}]
  %s6 = inlined_call_operand.vmem [shape: f32[1,8], index: 6, kind: input, shape index: {}]
  %s7 = inlined_call_operand.hbm [shape: f32[2,16,16,16], index: 7, kind: output, shape index: {}]
  %s8 = sld [smem:[#allocation0]]
  $region61: #{tpu_custom_call.1} parent=0
    _
  %s10 = ssub.s32 1, %s8
  %s11 = scalar_select 0, %s10, %s8
  $region1: #{tpu_custom_call.1} parent=0
    #allocation3 [shape = 'u8[262144]{0}', space=vmem, size = 0x40000, scoped, tag = 'output window, operand 0']
    #allocation4 [shape = 's32[2]{0}', space=sflag, size = 0x8, scoped, tag = 'scoped memory for tpu_custom_call.1']
    %12 = vsyncpa [#allocation4], 0
    %s13 = scalar_lea.sflag [#allocation4], 1
    %14 = vsyncpa %s13, 0
    loop: start=0, step=1, limit=4
    $region2: #{tpu_custom_call.1} parent=1 // loop_pre_header
      _
    $region3: #{tpu_custom_call.1} parent=1 // loop_header
      %s16 = sphi 0, %s20
      %p17 = scmp.ge.s32.totalorder %s16, 4
      %s26 = sphi 0, %s28
      %s29 = sphi 0, %s26
      %s30 = sphi 0, %s29
      %s46 = sphi 0, %s30
      %s52 = sphi 0, %s54
      %s55 = sphi 0, %s52
      %s56 = sphi 0, %s55
      %s72 = sphi 0, %s56
      %s76 = sphi 0, %s76
      %s78 = sphi 0, %s76
      %s79 = sphi 0, %s78
      %s93 = sphi 0, %s79
      %s97 = sphi 0, %s97
      %s99 = sphi 0, %s97
      %s100 = sphi 0, %s99
      %s114 = sphi 0, %s100
      %s118 = sphi 0, %s118
      %s120 = sphi 0, %s118
      %s121 = sphi 0, %s120
      %s135 = sphi 0, %s121
      %s139 = sphi 0, %s139
      %s141 = sphi 0, %s139
      %s142 = sphi 0, %s141
      %s156 = sphi 0, %s142
      %s160 = sphi 0, %s160
      %s162 = sphi 0, %s160
      %s163 = sphi 0, %s162
      %s177 = sphi 0, %s163
      %s183 = sphi 0, %s185
      %s186 = sphi 0, %s183
      %s187 = sphi 0, %s186
      %s203 = sphi 0, %s187
    $region4: #{tpu_custom_call.1} parent=1 // loop_header_branch
      %19 = sbr.rel (%p17) target = $region8
    $region5: #{tpu_custom_call.1} parent=1 // loop_body
      %s21 = ssub.s32 %s16, 1
      %s22 = ssub.s32 %s16, 2
      %s23 = sadd.s32 %s16, 1
      %s24 = ssub.s32 %s16, %s23
      %p25 = scmp.eq.s32.totalorder %s24, 0
      %s27 = sadd.s32 %s26, 1
      %s28 = scalar_select %p25, %s26, %s27
      %p31 = pneg %p25
      %p32 = scmp.eq.s32.totalorder %s16, 1
      %p33 = por %p31, %p32
      %p34 = scmp.ne.s32.totalorder %s26, %s29
      %p35 = scmp.eq.s32.totalorder %s16, 0
      %p36 = por %p34, %p35
      %p37 = scmp.ne.s32.totalorder %s26, %s29
      %p38 = scmp.eq.s32.totalorder %s21, 1
      %p39 = por %p37, %p38
      %p40 = scmp.ne.s32.totalorder %s29, %s30
      %p41 = scmp.eq.s32.totalorder %s21, 0
      %p42 = por %p40, %p41
      %p43 = scmp.ne.s32.totalorder %s29, %s30
      %p44 = scmp.eq.s32.totalorder %s22, 1
      %p45 = por %p43, %p44
      %p47 = scmp.ne.s32.totalorder %s30, %s46
      %p48 = scmp.eq.s32.totalorder %s22, 0
      %p49 = por %p47, %p48
      %s50 = ssub.s32 %s16, %s23
      %p51 = scmp.eq.s32.totalorder %s50, 0
      %s53 = sadd.s32 %s52, 1
      %s54 = scalar_select %p51, %s52, %s53
      %p57 = pneg %p51
      %p58 = scmp.eq.s32.totalorder %s16, 1
      %p59 = por %p57, %p58
      %p60 = scmp.ne.s32.totalorder %s52, %s55
      %p61 = scmp.eq.s32.totalorder %s16, 0
      %p62 = por %p60, %p61
      %p63 = scmp.ne.s32.totalorder %s52, %s55
      %p64 = scmp.eq.s32.totalorder %s21, 1
      %p65 = por %p63, %p64
      %p66 = scmp.ne.s32.totalorder %s55, %s56
      %p67 = scmp.eq.s32.totalorder %s21, 0
      %p68 = por %p66, %p67
      %p69 = scmp.ne.s32.totalorder %s55, %s56
      %p70 = scmp.eq.s32.totalorder %s22, 1
      %p71 = por %p69, %p70
      %p73 = scmp.ne.s32.totalorder %s56, %s72
      %p74 = scmp.eq.s32.totalorder %s22, 0
      %p75 = por %p73, %p74
      %s77 = sadd.s32 %s76, 1
      %p80 = scmp.eq.s32.totalorder %s16, 1
      %p81 = scmp.ne.s32.totalorder %s76, %s78
      %p82 = scmp.eq.s32.totalorder %s16, 0
      %p83 = por %p81, %p82
      %p84 = scmp.ne.s32.totalorder %s76, %s78
      %p85 = scmp.eq.s32.totalorder %s21, 1
      %p86 = por %p84, %p85
      %p87 = scmp.ne.s32.totalorder %s78, %s79
      %p88 = scmp.eq.s32.totalorder %s21, 0
      %p89 = por %p87, %p88
      %p90 = scmp.ne.s32.totalorder %s78, %s79
      %p91 = scmp.eq.s32.totalorder %s22, 1
      %p92 = por %p90, %p91
      %p94 = scmp.ne.s32.totalorder %s79, %s93
      %p95 = scmp.eq.s32.totalorder %s22, 0
      %p96 = por %p94, %p95
      %s98 = sadd.s32 %s97, 1
      %p101 = scmp.eq.s32.totalorder %s16, 1
      %p102 = scmp.ne.s32.totalorder %s97, %s99
      %p103 = scmp.eq.s32.totalorder %s16, 0
      %p104 = por %p102, %p103
      %p105 = scmp.ne.s32.totalorder %s97, %s99
      %p106 = scmp.eq.s32.totalorder %s21, 1
      %p107 = por %p105, %p106
      %p108 = scmp.ne.s32.totalorder %s99, %s100
      %p109 = scmp.eq.s32.totalorder %s21, 0
      %p110 = por %p108, %p109
      %p111 = scmp.ne.s32.totalorder %s99, %s100
      %p112 = scmp.eq.s32.totalorder %s22, 1
      %p113 = por %p111, %p112
      %p115 = scmp.ne.s32.totalorder %s100, %s114
      %p116 = scmp.eq.s32.totalorder %s22, 0
      %p117 = por %p115, %p116
      %s119 = sadd.s32 %s118, 1
      %p122 = scmp.eq.s32.totalorder %s16, 1
      %p123 = scmp.ne.s32.totalorder %s118, %s120
      %p124 = scmp.eq.s32.totalorder %s16, 0
      %p125 = por %p123, %p124
      %p126 = scmp.ne.s32.totalorder %s118, %s120
      %p127 = scmp.eq.s32.totalorder %s21, 1
      %p128 = por %p126, %p127
      %p129 = scmp.ne.s32.totalorder %s120, %s121
      %p130 = scmp.eq.s32.totalorder %s21, 0
      %p131 = por %p129, %p130
      %p132 = scmp.ne.s32.totalorder %s120, %s121
      %p133 = scmp.eq.s32.totalorder %s22, 1
      %p134 = por %p132, %p133
      %p136 = scmp.ne.s32.totalorder %s121, %s135
      %p137 = scmp.eq.s32.totalorder %s22, 0
      %p138 = por %p136, %p137
      %s140 = sadd.s32 %s139, 1
      %p143 = scmp.eq.s32.totalorder %s16, 1
      %p144 = scmp.ne.s32.totalorder %s139, %s141
      %p145 = scmp.eq.s32.totalorder %s16, 0
      %p146 = por %p144, %p145
      %p147 = scmp.ne.s32.totalorder %s139, %s141
      %p148 = scmp.eq.s32.totalorder %s21, 1
      %p149 = por %p147, %p148
      %p150 = scmp.ne.s32.totalorder %s141, %s142
      %p151 = scmp.eq.s32.totalorder %s21, 0
      %p152 = por %p150, %p151
      %p153 = scmp.ne.s32.totalorder %s141, %s142
      %p154 = scmp.eq.s32.totalorder %s22, 1
      %p155 = por %p153, %p154
      %p157 = scmp.ne.s32.totalorder %s142, %s156
      %p158 = scmp.eq.s32.totalorder %s22, 0
      %p159 = por %p157, %p158
      %s161 = sadd.s32 %s160, 1
      %p164 = scmp.eq.s32.totalorder %s16, 1
      %p165 = scmp.ne.s32.totalorder %s160, %s162
      %p166 = scmp.eq.s32.totalorder %s16, 0
      %p167 = por %p165, %p166
      %p168 = scmp.ne.s32.totalorder %s160, %s162
      %p169 = scmp.eq.s32.totalorder %s21, 1
      %p170 = por %p168, %p169
      %p171 = scmp.ne.s32.totalorder %s162, %s163
      %p172 = scmp.eq.s32.totalorder %s21, 0
      %p173 = por %p171, %p172
      %p174 = scmp.ne.s32.totalorder %s162, %s163
      %p175 = scmp.eq.s32.totalorder %s22, 1
      %p176 = por %p174, %p175
      %p178 = scmp.ne.s32.totalorder %s163, %s177
      %p179 = scmp.eq.s32.totalorder %s22, 0
      %p180 = por %p178, %p179
      %s181 = ssub.s32 %s16, %s23
      %p182 = scmp.eq.s32.totalorder %s181, 0
      %s184 = sadd.s32 %s183, 1
      %s185 = scalar_select %p182, %s183, %s184
      %p188 = pneg %p182
      %p189 = scmp.eq.s32.totalorder %s16, 1
      %p190 = por %p188, %p189
      %p191 = scmp.ne.s32.totalorder %s183, %s186
      %p192 = scmp.eq.s32.totalorder %s16, 0
      %p193 = por %p191, %p192
      %p194 = scmp.ne.s32.totalorder %s183, %s186
      %p195 = scmp.eq.s32.totalorder %s21, 1
      %p196 = por %p194, %p195
      %p197 = scmp.ne.s32.totalorder %s186, %s187
      %p198 = scmp.eq.s32.totalorder %s21, 0
      %p199 = por %p197, %p198
      %p200 = scmp.ne.s32.totalorder %s186, %s187
      %p201 = scmp.eq.s32.totalorder %s22, 1
      %p202 = por %p200, %p201
      %p204 = scmp.ne.s32.totalorder %s187, %s203
      %p205 = scmp.eq.s32.totalorder %s22, 0
      %p206 = por %p204, %p205
      %p207 = scmp.le.s32.totalorder 1, %s16
      %p208 = scmp.lt.s32.totalorder %s16, 3
      %p209 = pnand %p207, %p208
      %p210 = pneg %p209
      // Predicated region
      $region9: #{tpu_custom_call.1} parent=5 // pred_check
        _
      $region10: #{tpu_custom_call.1} parent=5 // pred_check_branch
        %212 = sbr.rel (%p209) target = $region12
      $region11: #{tpu_custom_call.1} parent=5 // pred_region
        %s213 = ssub.s32 %s16, 1
        // Predicated region
        $region13: #{tpu_custom_call.1} parent=11 // pred_check
          %p214 = pneg %p89
        $region14: #{tpu_custom_call.1} parent=11 // pred_check_branch
          %216 = sbr.rel (%p214) target = $region16
        $region15: #{tpu_custom_call.1} parent=11 // pred_region
          _
        $region16: #{tpu_custom_call.1} parent=11 // pred_fallthru
          _
        // Predicated region
        $region17: #{tpu_custom_call.1} parent=11 // pred_check
          %p217 = pneg %p110
        $region18: #{tpu_custom_call.1} parent=11 // pred_check_branch
          %219 = sbr.rel (%p217) target = $region20
        $region19: #{tpu_custom_call.1} parent=11 // pred_region
          _
        $region20: #{tpu_custom_call.1} parent=11 // pred_fallthru
          _
        // Predicated region
        $region21: #{tpu_custom_call.1} parent=11 // pred_check
          %p220 = pneg %p131
        $region22: #{tpu_custom_call.1} parent=11 // pred_check_branch
          %222 = sbr.rel (%p220) target = $region24
        $region23: #{tpu_custom_call.1} parent=11 // pred_region
          _
        $region24: #{tpu_custom_call.1} parent=11 // pred_fallthru
          _
        // Predicated region
        $region25: #{tpu_custom_call.1} parent=11 // pred_check
          %p223 = pneg %p152
        $region26: #{tpu_custom_call.1} parent=11 // pred_check_branch
          %225 = sbr.rel (%p223) target = $region28
        $region27: #{tpu_custom_call.1} parent=11 // pred_region
          _
        $region28: #{tpu_custom_call.1} parent=11 // pred_fallthru
          _
        // Predicated region
        $region29: #{tpu_custom_call.1} parent=11 // pred_check
          %p226 = pneg %p173
        $region30: #{tpu_custom_call.1} parent=11 // pred_check_branch
          %228 = sbr.rel (%p226) target = $region32
        $region31: #{tpu_custom_call.1} parent=11 // pred_region
          _
        $region32: #{tpu_custom_call.1} parent=11 // pred_fallthru
          _
      $region12: #{tpu_custom_call.1} parent=5 // pred_fallthru
        _
      %p229 = scmp.lt.s32.totalorder %s16, 2
      // Predicated region
      $region33: #{tpu_custom_call.1} parent=5 // pred_check
        %p230 = pneg %p229
      $region34: #{tpu_custom_call.1} parent=5 // pred_check_branch
        %232 = sbr.rel (%p230) target = $region36
      $region35: #{tpu_custom_call.1} parent=5 // pred_region
        // Predicated region
        $region37: #{tpu_custom_call.1} parent=35 // pred_check
          %p233 = pneg %p36
        $region38: #{tpu_custom_call.1} parent=35 // pred_check_branch
          %235 = sbr.rel (%p233) target = $region40
        $region39: #{tpu_custom_call.1} parent=35 // pred_region
          %p236 = scmp.lt.s32.totalorder %s16, 1
          %s237 = scalar_select %p236, %s16, 1
          %s238 = smul.addr %s237, 32
          %s239 = smul.addr %s238, 8
          %s240 = scalar_lea.vmem %s0, %s239
        $region40: #{tpu_custom_call.1} parent=35 // pred_fallthru
          _
        // Predicated region
        $region41: #{tpu_custom_call.1} parent=35 // pred_check
          %p241 = pneg %p62
        $region42: #{tpu_custom_call.1} parent=35 // pred_check_branch
          %243 = sbr.rel (%p241) target = $region44
        $region43: #{tpu_custom_call.1} parent=35 // pred_region
          %p244 = scmp.lt.s32.totalorder %s16, 1
          %s245 = scalar_select %p244, %s16, 1
          %s246 = smul.addr %s245, 32
          %s247 = smul.addr %s246, 8
          %s248 = scalar_lea.vmem %s1, %s247
        $region44: #{tpu_custom_call.1} parent=35 // pred_fallthru
          _
      $region36: #{tpu_custom_call.1} parent=5 // pred_fallthru
        _
      %p249 = scmp.le.s32.totalorder 1, %s16
      %p250 = scmp.lt.s32.totalorder %s16, 3
      %p251 = pnand %p249, %p250
      %p252 = pneg %p251
      // Predicated region
      $region45: #{tpu_custom_call.1} parent=5 // pred_check
        _
      $region46: #{tpu_custom_call.1} parent=5 // pred_check_branch
        %254 = sbr.rel (%p251) target = $region48
      $region47: #{tpu_custom_call.1} parent=5 // pred_region
        %s255 = ssub.s32 %s16, 1
        %p256 = scmp.lt.s32.totalorder %s21, 1
        %s257 = scalar_select %p256, %s21, 1
        %s258 = smul.addr %s257, 32
        %s259 = smul.addr %s258, 8
        %s260 = scalar_lea.vmem %s0, %s259
        %p261 = pneg %p42
        %p262 = pneg %p39
        %p263 = scmp.lt.s32.totalorder %s21, 1
        %s264 = scalar_select %p263, %s21, 1
        %s265 = smul.addr %s264, 32
        %s266 = smul.addr %s265, 8
        %s267 = scalar_lea.vmem %s1, %s266
        %p268 = pneg %p68
        %p269 = pneg %p65
        %p270 = pneg %p89
        %p271 = pneg %p86
        %p272 = pneg %p110
        %p273 = pneg %p107
        %p274 = pneg %p131
        %p275 = pneg %p128
        %p276 = pneg %p152
        %p277 = pneg %p149
        %p278 = pneg %p173
        %p279 = pneg %p170
        %p280 = pneg %p199
        %p281 = pneg %p196
        %s282 = sand.u32 %s186, 1
        %s283 = scalar_lea.sflag [#allocation4], %s282
        %s284 = sand.u32 %s186, 1
        %s285 = smul.addr %s284, 256
        %s286 = scalar_lea.vmem [#allocation3], %s285
        %p287 = scmp.lt.s32.totalorder %s21, 1
        %s288 = scalar_select %p287, %s21, 1
        %s289 = smul.addr %s288, 32
        %s290 = smul.addr %s289, 8
        %s291 = scalar_lea.vmem %s0, %s290
        %p292 = scmp.lt.s32.totalorder %s21, 1
        %s293 = scalar_select %p292, %s21, 1
        %s294 = smul.addr %s293, 32
        %s295 = smul.addr %s294, 8
        %s296 = scalar_lea.vmem %s1, %s295
        %v297 = vld [vmem:[%s296] sm:$0xff]
        %v298 = vld [vmem:[%s296 + $0x8] sm:$0xff]
        %v299 = vld [vmem:[%s296 + $0x10] sm:$0xff]
        %v300 = vld [vmem:[%s296 + $0x18] sm:$0xff]
        %v301 = vld [vmem:[%s296 + $0x20] sm:$0xff]
        %v302 = vld [vmem:[%s296 + $0x28] sm:$0xff]
        %v303 = vld [vmem:[%s296 + $0x30] sm:$0xff]
        %v304 = vld [vmem:[%s296 + $0x38] sm:$0xff]
        %v305 = vld [vmem:[%s296 + $0x40] sm:$0xff]
        %v306 = vld [vmem:[%s296 + $0x48] sm:$0xff]
        %v307 = vld [vmem:[%s296 + $0x50] sm:$0xff]
        %v308 = vld [vmem:[%s296 + $0x58] sm:$0xff]
        %v309 = vld [vmem:[%s296 + $0x60] sm:$0xff]
        %v310 = vld [vmem:[%s296 + $0x68] sm:$0xff]
        %v311 = vld [vmem:[%s296 + $0x70] sm:$0xff]
        %v312 = vld [vmem:[%s296 + $0x78] sm:$0xff]
        %v313 = vld [vmem:[%s296 + $0x80] sm:$0xff]
        %v314 = vld [vmem:[%s296 + $0x88] sm:$0xff]
        %v315 = vld [vmem:[%s296 + $0x90] sm:$0xff]
        %v316 = vld [vmem:[%s296 + $0x98] sm:$0xff]
        %v317 = vld [vmem:[%s296 + $0xa0] sm:$0xff]
        %v318 = vld [vmem:[%s296 + $0xa8] sm:$0xff]
        %v319 = vld [vmem:[%s296 + $0xb0] sm:$0xff]
        %v320 = vld [vmem:[%s296 + $0xb8] sm:$0xff]
        %v321 = vld [vmem:[%s296 + $0xc0] sm:$0xff]
        %v322 = vld [vmem:[%s296 + $0xc8] sm:$0xff]
        %v323 = vld [vmem:[%s296 + $0xd0] sm:$0xff]
        %v324 = vld [vmem:[%s296 + $0xd8] sm:$0xff]
        %v325 = vld [vmem:[%s296 + $0xe0] sm:$0xff]
        %v326 = vld [vmem:[%s296 + $0xe8] sm:$0xff]
        %v327 = vld [vmem:[%s296 + $0xf0] sm:$0xff]
        %v328 = vld [vmem:[%s296 + $0xf8] sm:$0xff]
        %v329 = vld [vmem:[%s2] sm:$0xff]
        %v330 = vld [vmem:[%s3] sm:$0x1]
        %v332 = vperm.slane %v330, 0
        %vm334 = vcmask 64512
        %v336 = vsel %vm334, %v297, 0
        %v339 = vsel %vm334, %v298, 0
        %v342 = vsel %vm334, %v299, 0
        %v345 = vsel %vm334, %v300, 0
        %v348 = vsel %vm334, %v301, 0
        %v351 = vsel %vm334, %v302, 0
        %v354 = vsel %vm334, %v303, 0
        %v357 = vsel %vm334, %v304, 0
        %v360 = vsel %vm334, %v305, 0
        %v363 = vsel %vm334, %v306, 0
        %v366 = vsel %vm334, %v307, 0
        %v369 = vsel %vm334, %v308, 0
        %v372 = vsel %vm334, %v309, 0
        %v375 = vsel %vm334, %v310, 0
        %v378 = vsel %vm334, %v311, 0
        %v381 = vsel %vm334, %v312, 0
        %v384 = vsel %vm334, %v313, 0
        %v387 = vsel %vm334, %v314, 0
        %v390 = vsel %vm334, %v315, 0
        %v393 = vsel %vm334, %v316, 0
        %v396 = vsel %vm334, %v317, 0
        %v399 = vsel %vm334, %v318, 0
        %v402 = vsel %vm334, %v319, 0
        %v405 = vsel %vm334, %v320, 0
        %v408 = vsel %vm334, %v321, 0
        %v411 = vsel %vm334, %v322, 0
        %v414 = vsel %vm334, %v323, 0
        %v417 = vsel %vm334, %v324, 0
        %v420 = vsel %vm334, %v325, 0
        %v423 = vsel %vm334, %v326, 0
        %v426 = vsel %vm334, %v327, 0
        %v429 = vsel %vm334, %v328, 0
        %431 = vmatpush.msra.mxu0 0.0
        %432 = vmatpush.msra.mxu0 0.0
        %433 = vmatpush.msra.mxu0 0.0
        %434 = vmatpush.msra.mxu0 0.0
        %435 = vmatpush.msra.mxu0 0.0
        %436 = vmatpush.msra.mxu0 0.0
        %437 = vmatpush.msra.mxu0 0.0
        %438 = vmatpush.msra.mxu0 0.0
        %439 = vmatpush.msra.mxu0 0.0
        %440 = vmatpush.msra.mxu0 0.0
        %441 = vmatpush.msra.mxu0 0.0
        %442 = vmatpush.msra.mxu0 0.0
        %443 = vmatpush.msra.mxu0 0.0
        %444 = vmatpush.msra.mxu0 0.0
        %445 = vmatpush.msra.mxu0 0.0
        %446 = vmatpush.msra.mxu0 %v329
        %447 = vmatmul.f32.gmra.mxu0 %v336
        %v448 = vpop.f32.mrf.mxu0
        %v449 = vadd.f32 %v332, %v448
        %450 = vmatmul.f32.gmra.mxu0 %v339
        %v451 = vpop.f32.mrf.mxu0
        %v452 = vadd.f32 %v332, %v451
        %453 = vmatmul.f32.gmra.mxu0 %v342
        %v454 = vpop.f32.mrf.mxu0
        %v455 = vadd.f32 %v332, %v454
        %456 = vmatmul.f32.gmra.mxu0 %v345
        %v457 = vpop.f32.mrf.mxu0
        %v458 = vadd.f32 %v332, %v457
        %459 = vmatmul.f32.gmra.mxu0 %v348
        %v460 = vpop.f32.mrf.mxu0
        %v461 = vadd.f32 %v332, %v460
        %462 = vmatmul.f32.gmra.mxu0 %v351
        %v463 = vpop.f32.mrf.mxu0
        %v464 = vadd.f32 %v332, %v463
        %465 = vmatmul.f32.gmra.mxu0 %v354
        %v466 = vpop.f32.mrf.mxu0
        %v467 = vadd.f32 %v332, %v466
        %468 = vmatmul.f32.gmra.mxu0 %v357
        %v469 = vpop.f32.mrf.mxu0
        %v470 = vadd.f32 %v332, %v469
        %471 = vmatmul.f32.gmra.mxu0 %v360
        %v472 = vpop.f32.mrf.mxu0
        %v473 = vadd.f32 %v332, %v472
        %474 = vmatmul.f32.gmra.mxu0 %v363
        %v475 = vpop.f32.mrf.mxu0
        %v476 = vadd.f32 %v332, %v475
        %477 = vmatmul.f32.gmra.mxu0 %v366
        %v478 = vpop.f32.mrf.mxu0
        %v479 = vadd.f32 %v332, %v478
        %480 = vmatmul.f32.gmra.mxu0 %v369
        %v481 = vpop.f32.mrf.mxu0
        %v482 = vadd.f32 %v332, %v481
        %483 = vmatmul.f32.gmra.mxu0 %v372
        %v484 = vpop.f32.mrf.mxu0
        %v485 = vadd.f32 %v332, %v484
        %486 = vmatmul.f32.gmra.mxu0 %v375
        %v487 = vpop.f32.mrf.mxu0
        %v488 = vadd.f32 %v332, %v487
        %489 = vmatmul.f32.gmra.mxu0 %v378
        %v490 = vpop.f32.mrf.mxu0
        %v491 = vadd.f32 %v332, %v490
        %492 = vmatmul.f32.gmra.mxu0 %v381
        %v493 = vpop.f32.mrf.mxu0
        %v494 = vadd.f32 %v332, %v493
        %495 = vmatmul.f32.gmra.mxu0 %v384
        %v496 = vpop.f32.mrf.mxu0
        %v497 = vadd.f32 %v332, %v496
        %498 = vmatmul.f32.gmra.mxu0 %v387
        %v499 = vpop.f32.mrf.mxu0
        %v500 = vadd.f32 %v332, %v499
        %501 = vmatmul.f32.gmra.mxu0 %v390
        %v502 = vpop.f32.mrf.mxu0
        %v503 = vadd.f32 %v332, %v502
        %504 = vmatmul.f32.gmra.mxu0 %v393
        %v505 = vpop.f32.mrf.mxu0
        %v506 = vadd.f32 %v332, %v505
        %507 = vmatmul.f32.gmra.mxu0 %v396
        %v508 = vpop.f32.mrf.mxu0
        %v509 = vadd.f32 %v332, %v508
        %510 = vmatmul.f32.gmra.mxu0 %v399
        %v511 = vpop.f32.mrf.mxu0
        %v512 = vadd.f32 %v332, %v511
        %513 = vmatmul.f32.gmra.mxu0 %v402
        %v514 = vpop.f32.mrf.mxu0
        %v515 = vadd.f32 %v332, %v514
        %516 = vmatmul.f32.gmra.mxu0 %v405
        %v517 = vpop.f32.mrf.mxu0
        %v518 = vadd.f32 %v332, %v517
        %519 = vmatmul.f32.gmra.mxu0 %v408
        %v520 = vpop.f32.mrf.mxu0
        %v521 = vadd.f32 %v332, %v520
        %522 = vmatmul.f32.gmra.mxu0 %v411
        %v523 = vpop.f32.mrf.mxu0
        %v524 = vadd.f32 %v332, %v523
        %525 = vmatmul.f32.gmra.mxu0 %v414
        %v526 = vpop.f32.mrf.mxu0
        %v527 = vadd.f32 %v332, %v526
        %528 = vmatmul.f32.gmra.mxu0 %v417
        %v529 = vpop.f32.mrf.mxu0
        %v530 = vadd.f32 %v332, %v529
        %531 = vmatmul.f32.gmra.mxu0 %v420
        %v532 = vpop.f32.mrf.mxu0
        %v533 = vadd.f32 %v332, %v532
        %534 = vmatmul.f32.gmra.mxu0 %v423
        %v535 = vpop.f32.mrf.mxu0
        %v536 = vadd.f32 %v332, %v535
        %537 = vmatmul.f32.gmra.mxu0 %v426
        %v538 = vpop.f32.mrf.mxu0
        %v539 = vadd.f32 %v332, %v538
        %540 = vmatmul.f32.gmra.mxu0 %v429
        %v541 = vpop.f32.mrf.mxu0
        %v542 = vadd.f32 %v332, %v541
        %543 = vdwg.mxu0
        %v544 = vmax.f32 %v449, 0.0
        %v545 = vmax.f32 %v452, 0.0
        %v546 = vmax.f32 %v455, 0.0
        %v547 = vmax.f32 %v458, 0.0
        %v548 = vmax.f32 %v461, 0.0
        %v549 = vmax.f32 %v464, 0.0
        %v550 = vmax.f32 %v467, 0.0
        %v551 = vmax.f32 %v470, 0.0
        %v552 = vmax.f32 %v473, 0.0
        %v553 = vmax.f32 %v476, 0.0
        %v554 = vmax.f32 %v479, 0.0
        %v555 = vmax.f32 %v482, 0.0
        %v556 = vmax.f32 %v485, 0.0
        %v557 = vmax.f32 %v488, 0.0
        %v558 = vmax.f32 %v491, 0.0
        %v559 = vmax.f32 %v494, 0.0
        %v560 = vmax.f32 %v497, 0.0
        %v561 = vmax.f32 %v500, 0.0
        %v562 = vmax.f32 %v503, 0.0
        %v563 = vmax.f32 %v506, 0.0
        %v564 = vmax.f32 %v509, 0.0
        %v565 = vmax.f32 %v512, 0.0
        %v566 = vmax.f32 %v515, 0.0
        %v567 = vmax.f32 %v518, 0.0
        %v568 = vmax.f32 %v521, 0.0
        %v569 = vmax.f32 %v524, 0.0
        %v570 = vmax.f32 %v527, 0.0
        %v571 = vmax.f32 %v530, 0.0
        %v572 = vmax.f32 %v533, 0.0
        %v573 = vmax.f32 %v536, 0.0
        %v574 = vmax.f32 %v539, 0.0
        %v575 = vmax.f32 %v542, 0.0
        %576 = vst.msk [vmem:[#allocation2] sm:$0xff] %vm334, 0.0
        %577 = vst.msk [vmem:[#allocation2 + $0x8] sm:$0xff] %vm334, 0.0
        %vm578 = vcmask 58368
        %579 = vst.msk [vmem:[#allocation2 + $0x10] sm:$0x3] %vm578, 0.0
        %s580 = scalar_lea.vmem [#allocation2], 408
        %581 = vst.msk [vmem:[%s580] sm:$0xff] %vm334, 0.0
        %582 = vst.msk [vmem:[%s580 + $0x8] sm:$0xff] %vm334, 0.0
        %583 = vst.msk [vmem:[%s580 + $0x10] sm:$0x3] %vm578, 0.0
        %s584 = scalar_lea.vmem [#allocation2], 24
        %vm585 = vcmask 57344
        %586 = vst.msk [vmem:[%s584] sm:$0x1] %vm585, 0.0
        %587 = vst.msk [vmem:[%s584 + $0x18] sm:$0x1] %vm585, 0.0
        %588 = vst.msk [vmem:[%s584 + $0x30] sm:$0x1] %vm585, 0.0
        %589 = vst.msk [vmem:[%s584 + $0x48] sm:$0x1] %vm585, 0.0
        %590 = vst.msk [vmem:[%s584 + $0x60] sm:$0x1] %vm585, 0.0
        %591 = vst.msk [vmem:[%s584 + $0x78] sm:$0x1] %vm585, 0.0
        %592 = vst.msk [vmem:[%s584 + $0x90] sm:$0x1] %vm585, 0.0
        %593 = vst.msk [vmem:[%s584 + $0xa8] sm:$0x1] %vm585, 0.0
        %594 = vst.msk [vmem:[%s584 + $0xc0] sm:$0x1] %vm585, 0.0
        %595 = vst.msk [vmem:[%s584 + $0xd8] sm:$0x1] %vm585, 0.0
        %596 = vst.msk [vmem:[%s584 + $0xf0] sm:$0x1] %vm585, 0.0
        %597 = vst.msk [vmem:[%s584 + $0x108] sm:$0x1] %vm585, 0.0
        %598 = vst.msk [vmem:[%s584 + $0x120] sm:$0x1] %vm585, 0.0
        %599 = vst.msk [vmem:[%s584 + $0x138] sm:$0x1] %vm585, 0.0
        %600 = vst.msk [vmem:[%s584 + $0x150] sm:$0x1] %vm585, 0.0
        %601 = vst.msk [vmem:[%s584 + $0x168] sm:$0x1] %vm585, 0.0
        %602 = vst.msk [vmem:[%s584 + $0x11] sm:$0x1] %vm585, 0.0
        %603 = vst.msk [vmem:[%s584 + $0x29] sm:$0x1] %vm585, 0.0
        %604 = vst.msk [vmem:[%s584 + $0x41] sm:$0x1] %vm585, 0.0
        %605 = vst.msk [vmem:[%s584 + $0x59] sm:$0x1] %vm585, 0.0
        %606 = vst.msk [vmem:[%s584 + $0x71] sm:$0x1] %vm585, 0.0
        %607 = vst.msk [vmem:[%s584 + $0x89] sm:$0x1] %vm585, 0.0
        %608 = vst.msk [vmem:[%s584 + $0xa1] sm:$0x1] %vm585, 0.0
        %609 = vst.msk [vmem:[%s584 + $0xb9] sm:$0x1] %vm585, 0.0
        %610 = vst.msk [vmem:[%s584 + $0xd1] sm:$0x1] %vm585, 0.0
        %611 = vst.msk [vmem:[%s584 + $0xe9] sm:$0x1] %vm585, 0.0
        %612 = vst.msk [vmem:[%s584 + $0x101] sm:$0x1] %vm585, 0.0
        %613 = vst.msk [vmem:[%s584 + $0x119] sm:$0x1] %vm585, 0.0
        %614 = vst.msk [vmem:[%s584 + $0x131] sm:$0x1] %vm585, 0.0
        %615 = vst.msk [vmem:[%s584 + $0x149] sm:$0x1] %vm585, 0.0
        %616 = vst.msk [vmem:[%s584 + $0x161] sm:$0x1] %vm585, 0.0
        %617 = vst.msk [vmem:[%s584 + $0x179] sm:$0x1] %vm585, 0.0
        %618 = vst.msk [vmem:[%s584 + $0x1] sm:$0xff] %vm334, %v544
        %619 = vst.msk [vmem:[%s584 + $0x9] sm:$0xff] %vm334, %v545
        %620 = vst.msk [vmem:[%s584 + $0x19] sm:$0xff] %vm334, %v546
        %621 = vst.msk [vmem:[%s584 + $0x21] sm:$0xff] %vm334, %v547
        %622 = vst.msk [vmem:[%s584 + $0x31] sm:$0xff] %vm334, %v548
        %623 = vst.msk [vmem:[%s584 + $0x39] sm:$0xff] %vm334, %v549
        %624 = vst.msk [vmem:[%s584 + $0x49] sm:$0xff] %vm334, %v550
        %625 = vst.msk [vmem:[%s584 + $0x51] sm:$0xff] %vm334, %v551
        %626 = vst.msk [vmem:[%s584 + $0x61] sm:$0xff] %vm334, %v552
        %627 = vst.msk [vmem:[%s584 + $0x69] sm:$0xff] %vm334, %v553
        %628 = vst.msk [vmem:[%s584 + $0x79] sm:$0xff] %vm334, %v554
        %629 = vst.msk [vmem:[%s584 + $0x81] sm:$0xff] %vm334, %v555
        %630 = vst.msk [vmem:[%s584 + $0x91] sm:$0xff] %vm334, %v556
        %631 = vst.msk [vmem:[%s584 + $0x99] sm:$0xff] %vm334, %v557
        %632 = vst.msk [vmem:[%s584 + $0xa9] sm:$0xff] %vm334, %v558
        %633 = vst.msk [vmem:[%s584 + $0xb1] sm:$0xff] %vm334, %v559
        %634 = vst.msk [vmem:[%s584 + $0xc1] sm:$0xff] %vm334, %v560
        %635 = vst.msk [vmem:[%s584 + $0xc9] sm:$0xff] %vm334, %v561
        %636 = vst.msk [vmem:[%s584 + $0xd9] sm:$0xff] %vm334, %v562
        %637 = vst.msk [vmem:[%s584 + $0xe1] sm:$0xff] %vm334, %v563
        %638 = vst.msk [vmem:[%s584 + $0xf1] sm:$0xff] %vm334, %v564
        %639 = vst.msk [vmem:[%s584 + $0xf9] sm:$0xff] %vm334, %v565
        %640 = vst.msk [vmem:[%s584 + $0x109] sm:$0xff] %vm334, %v566
        %641 = vst.msk [vmem:[%s584 + $0x111] sm:$0xff] %vm334, %v567
        %642 = vst.msk [vmem:[%s584 + $0x121] sm:$0xff] %vm334, %v568
        %643 = vst.msk [vmem:[%s584 + $0x129] sm:$0xff] %vm334, %v569
        %644 = vst.msk [vmem:[%s584 + $0x139] sm:$0xff] %vm334, %v570
        %645 = vst.msk [vmem:[%s584 + $0x141] sm:$0xff] %vm334, %v571
        %646 = vst.msk [vmem:[%s584 + $0x151] sm:$0xff] %vm334, %v572
        %647 = vst.msk [vmem:[%s584 + $0x159] sm:$0xff] %vm334, %v573
        %648 = vst.msk [vmem:[%s584 + $0x169] sm:$0xff] %vm334, %v574
        %649 = vst.msk [vmem:[%s584 + $0x171] sm:$0xff] %vm334, %v575
        %v650 = vld [vmem:[%s4] sm:$0x7]
        %v651 = vld [vmem:[%s4 + $0x4] sm:$0x7]
        %v652 = vld [vmem:[%s4 + $0x8] sm:$0x7]
        %v653 = vld [vmem:[#allocation2] sm:$0xff]
        %v654 = vld [vmem:[#allocation2 + $0x8] sm:$0xff]
        %v655 = vld [vmem:[#allocation2 + $0x18] sm:$0xff]
        %v656 = vld [vmem:[#allocation2 + $0x20] sm:$0xff]
        %v657 = vld [vmem:[#allocation2 + $0x30] sm:$0xff]
        %v658 = vld [vmem:[#allocation2 + $0x38] sm:$0xff]
        %v659 = vld [vmem:[#allocation2 + $0x48] sm:$0xff]
        %v660 = vld [vmem:[#allocation2 + $0x50] sm:$0xff]
        %v661 = vld [vmem:[#allocation2 + $0x60] sm:$0xff]
        %v662 = vld [vmem:[#allocation2 + $0x68] sm:$0xff]
        %v663 = vld [vmem:[#allocation2 + $0x78] sm:$0xff]
        %v664 = vld [vmem:[#allocation2 + $0x80] sm:$0xff]
        %v665 = vld [vmem:[#allocation2 + $0x90] sm:$0xff]
        %v666 = vld [vmem:[#allocation2 + $0x98] sm:$0xff]
        %v667 = vld [vmem:[#allocation2 + $0xa8] sm:$0xff]
        %v668 = vld [vmem:[#allocation2 + $0xb0] sm:$0xff]
        %v669 = vld [vmem:[#allocation2 + $0xc0] sm:$0xff]
        %v670 = vld [vmem:[#allocation2 + $0xc8] sm:$0xff]
        %v671 = vld [vmem:[#allocation2 + $0xd8] sm:$0xff]
        %v672 = vld [vmem:[#allocation2 + $0xe0] sm:$0xff]
        %v673 = vld [vmem:[#allocation2 + $0xf0] sm:$0xff]
        %v674 = vld [vmem:[#allocation2 + $0xf8] sm:$0xff]
        %v675 = vld [vmem:[#allocation2 + $0x108] sm:$0xff]
        %v676 = vld [vmem:[#allocation2 + $0x110] sm:$0xff]
        %v677 = vld [vmem:[#allocation2 + $0x120] sm:$0xff]
        %v678 = vld [vmem:[#allocation2 + $0x128] sm:$0xff]
        %v679 = vld [vmem:[#allocation2 + $0x138] sm:$0xff]
        %v680 = vld [vmem:[#allocation2 + $0x140] sm:$0xff]
        %v681 = vld [vmem:[#allocation2 + $0x150] sm:$0xff]
        %v682 = vld [vmem:[#allocation2 + $0x158] sm:$0xff]
        %v683 = vld [vmem:[#allocation2 + $0x168] sm:$0xff]
        %v684 = vld [vmem:[#allocation2 + $0x170] sm:$0xff]
        %v685 = vld [vmem:[#allocation2 + $0x180] sm:$0xff]
        %v686 = vld [vmem:[#allocation2 + $0x188] sm:$0xff]
        %v687 = vld [vmem:[#allocation2 + $0x198] sm:$0xff]
        %v688 = vld [vmem:[#allocation2 + $0x1a0] sm:$0xff]
        %v689 = vperm.slane %v650, 0
        %v690 = vmul.f32 %v653, %v689
        %v691 = vmul.f32 %v654, %v689
        %v692 = vmul.f32 %v655, %v689
        %v693 = vmul.f32 %v656, %v689
        %v694 = vmul.f32 %v657, %v689
        %v695 = vmul.f32 %v658, %v689
        %v696 = vmul.f32 %v659, %v689
        %v697 = vmul.f32 %v660, %v689
        %v698 = vmul.f32 %v661, %v689
        %v699 = vmul.f32 %v662, %v689
        %v700 = vmul.f32 %v663, %v689
        %v701 = vmul.f32 %v664, %v689
        %v702 = vmul.f32 %v665, %v689
        %v703 = vmul.f32 %v666, %v689
        %v704 = vmul.f32 %v667, %v689
        %v705 = vmul.f32 %v668, %v689
        %v706 = vmul.f32 %v669, %v689
        %v707 = vmul.f32 %v670, %v689
        %v708 = vmul.f32 %v671, %v689
        %v709 = vmul.f32 %v672, %v689
        %v710 = vmul.f32 %v673, %v689
        %v711 = vmul.f32 %v674, %v689
        %v712 = vmul.f32 %v675, %v689
        %v713 = vmul.f32 %v676, %v689
        %v714 = vmul.f32 %v677, %v689
        %v715 = vmul.f32 %v678, %v689
        %v716 = vmul.f32 %v679, %v689
        %v717 = vmul.f32 %v680, %v689
        %v718 = vmul.f32 %v681, %v689
        %v719 = vmul.f32 %v682, %v689
        %v720 = vmul.f32 %v683, %v689
        %v721 = vmul.f32 %v684, %v689
        %v722 = vperm.slane %v651, 0
        %v723 = vmul.f32 %v655, %v722
        %v724 = vmul.f32 %v656, %v722
        %v725 = vmul.f32 %v657, %v722
        %v726 = vmul.f32 %v658, %v722
        %v727 = vmul.f32 %v659, %v722
        %v728 = vmul.f32 %v660, %v722
        %v729 = vmul.f32 %v661, %v722
        %v730 = vmul.f32 %v662, %v722
        %v731 = vmul.f32 %v663, %v722
        %v732 = vmul.f32 %v664, %v722
        %v733 = vmul.f32 %v665, %v722
        %v734 = vmul.f32 %v666, %v722
        %v735 = vmul.f32 %v667, %v722
        %v736 = vmul.f32 %v668, %v722
        %v737 = vmul.f32 %v669, %v722
        %v738 = vmul.f32 %v670, %v722
        %v739 = vmul.f32 %v671, %v722
        %v740 = vmul.f32 %v672, %v722
        %v741 = vmul.f32 %v673, %v722
        %v742 = vmul.f32 %v674, %v722
        %v743 = vmul.f32 %v675, %v722
        %v744 = vmul.f32 %v676, %v722
        %v745 = vmul.f32 %v677, %v722
        %v746 = vmul.f32 %v678, %v722
        %v747 = vmul.f32 %v679, %v722
        %v748 = vmul.f32 %v680, %v722
        %v749 = vmul.f32 %v681, %v722
        %v750 = vmul.f32 %v682, %v722
        %v751 = vmul.f32 %v683, %v722
        %v752 = vmul.f32 %v684, %v722
        %v753 = vmul.f32 %v685, %v722
        %v754 = vmul.f32 %v686, %v722
        %v755 = vadd.f32 %v690, %v723
        %v756 = vadd.f32 %v691, %v724
        %v757 = vadd.f32 %v692, %v725
        %v758 = vadd.f32 %v693, %v726
        %v759 = vadd.f32 %v694, %v727
        %v760 = vadd.f32 %v695, %v728
        %v761 = vadd.f32 %v696, %v729
        %v762 = vadd.f32 %v697, %v730
        %v763 = vadd.f32 %v698, %v731
        %v764 = vadd.f32 %v699, %v732
        %v765 = vadd.f32 %v700, %v733
        %v766 = vadd.f32 %v701, %v734
        %v767 = vadd.f32 %v702, %v735
        %v768 = vadd.f32 %v703, %v736
        %v769 = vadd.f32 %v704, %v737
        %v770 = vadd.f32 %v705, %v738
        %v771 = vadd.f32 %v706, %v739
        %v772 = vadd.f32 %v707, %v740
        %v773 = vadd.f32 %v708, %v741
        %v774 = vadd.f32 %v709, %v742
        %v775 = vadd.f32 %v710, %v743
        %v776 = vadd.f32 %v711, %v744
        %v777 = vadd.f32 %v712, %v745
        %v778 = vadd.f32 %v713, %v746
        %v779 = vadd.f32 %v714, %v747
        %v780 = vadd.f32 %v715, %v748
        %v781 = vadd.f32 %v716, %v749
        %v782 = vadd.f32 %v717, %v750
        %v783 = vadd.f32 %v718, %v751
        %v784 = vadd.f32 %v719, %v752
        %v785 = vadd.f32 %v720, %v753
        %v786 = vadd.f32 %v721, %v754
        %v787 = vperm.slane %v652, 0
        %v788 = vmul.f32 %v657, %v787
        %v789 = vmul.f32 %v658, %v787
        %v790 = vmul.f32 %v659, %v787
        %v791 = vmul.f32 %v660, %v787
        %v792 = vmul.f32 %v661, %v787
        %v793 = vmul.f32 %v662, %v787
        %v794 = vmul.f32 %v663, %v787
        %v795 = vmul.f32 %v664, %v787
        %v796 = vmul.f32 %v665, %v787
        %v797 = vmul.f32 %v666, %v787
        %v798 = vmul.f32 %v667, %v787
        %v799 = vmul.f32 %v668, %v787
        %v800 = vmul.f32 %v669, %v787
        %v801 = vmul.f32 %v670, %v787
        %v802 = vmul.f32 %v671, %v787
        %v803 = vmul.f32 %v672, %v787
        %v804 = vmul.f32 %v673, %v787
        %v805 = vmul.f32 %v674, %v787
        %v806 = vmul.f32 %v675, %v787
        %v807 = vmul.f32 %v676, %v787
        %v808 = vmul.f32 %v677, %v787
        %v809 = vmul.f32 %v678, %v787
        %v810 = vmul.f32 %v679, %v787
        %v811 = vmul.f32 %v680, %v787
        %v812 = vmul.f32 %v681, %v787
        %v813 = vmul.f32 %v682, %v787
        %v814 = vmul.f32 %v683, %v787
        %v815 = vmul.f32 %v684, %v787
        %v816 = vmul.f32 %v685, %v787
        %v817 = vmul.f32 %v686, %v787
        %v818 = vmul.f32 %v687, %v787
        %v819 = vmul.f32 %v688, %v787
        %v820 = vadd.f32 %v755, %v788
        %v821 = vadd.f32 %v756, %v789
        %v822 = vadd.f32 %v757, %v790
        %v823 = vadd.f32 %v758, %v791
        %v824 = vadd.f32 %v759, %v792
        %v825 = vadd.f32 %v760, %v793
        %v826 = vadd.f32 %v761, %v794
        %v827 = vadd.f32 %v762, %v795
        %v828 = vadd.f32 %v763, %v796
        %v829 = vadd.f32 %v764, %v797
        %v830 = vadd.f32 %v765, %v798
        %v831 = vadd.f32 %v766, %v799
        %v832 = vadd.f32 %v767, %v800
        %v833 = vadd.f32 %v768, %v801
        %v834 = vadd.f32 %v769, %v802
        %v835 = vadd.f32 %v770, %v803
        %v836 = vadd.f32 %v771, %v804
        %v837 = vadd.f32 %v772, %v805
        %v838 = vadd.f32 %v773, %v806
        %v839 = vadd.f32 %v774, %v807
        %v840 = vadd.f32 %v775, %v808
        %v841 = vadd.f32 %v776, %v809
        %v842 = vadd.f32 %v777, %v810
        %v843 = vadd.f32 %v778, %v811
        %v844 = vadd.f32 %v779, %v812
        %v845 = vadd.f32 %v780, %v813
        %v846 = vadd.f32 %v781, %v814
        %v847 = vadd.f32 %v782, %v815
        %v848 = vadd.f32 %v783, %v816
        %v849 = vadd.f32 %v784, %v817
        %v850 = vadd.f32 %v785, %v818
        %v851 = vadd.f32 %v786, %v819
        %v852 = vld [vmem:[#allocation2 + $0x1] sm:$0xff]
        %v853 = vld [vmem:[#allocation2 + $0x9] sm:$0xff]
        %v854 = vld [vmem:[#allocation2 + $0x19] sm:$0xff]
        %v855 = vld [vmem:[#allocation2 + $0x21] sm:$0xff]
        %v856 = vld [vmem:[#allocation2 + $0x31] sm:$0xff]
        %v857 = vld [vmem:[#allocation2 + $0x39] sm:$0xff]
        %v858 = vld [vmem:[#allocation2 + $0x49] sm:$0xff]
        %v859 = vld [vmem:[#allocation2 + $0x51] sm:$0xff]
        %v860 = vld [vmem:[#allocation2 + $0x61] sm:$0xff]
        %v861 = vld [vmem:[#allocation2 + $0x69] sm:$0xff]
        %v862 = vld [vmem:[#allocation2 + $0x79] sm:$0xff]
        %v863 = vld [vmem:[#allocation2 + $0x81] sm:$0xff]
        %v864 = vld [vmem:[#allocation2 + $0x91] sm:$0xff]
        %v865 = vld [vmem:[#allocation2 + $0x99] sm:$0xff]
        %v866 = vld [vmem:[#allocation2 + $0xa9] sm:$0xff]
        %v867 = vld [vmem:[#allocation2 + $0xb1] sm:$0xff]
        %v868 = vld [vmem:[#allocation2 + $0xc1] sm:$0xff]
        %v869 = vld [vmem:[#allocation2 + $0xc9] sm:$0xff]
        %v870 = vld [vmem:[#allocation2 + $0xd9] sm:$0xff]
        %v871 = vld [vmem:[#allocation2 + $0xe1] sm:$0xff]
        %v872 = vld [vmem:[#allocation2 + $0xf1] sm:$0xff]
        %v873 = vld [vmem:[#allocation2 + $0xf9] sm:$0xff]
        %v874 = vld [vmem:[#allocation2 + $0x109] sm:$0xff]
        %v875 = vld [vmem:[#allocation2 + $0x111] sm:$0xff]
        %v876 = vld [vmem:[#allocation2 + $0x121] sm:$0xff]
        %v877 = vld [vmem:[#allocation2 + $0x129] sm:$0xff]
        %v878 = vld [vmem:[#allocation2 + $0x139] sm:$0xff]
        %v879 = vld [vmem:[#allocation2 + $0x141] sm:$0xff]
        %v880 = vld [vmem:[#allocation2 + $0x151] sm:$0xff]
        %v881 = vld [vmem:[#allocation2 + $0x159] sm:$0xff]
        %v882 = vld [vmem:[#allocation2 + $0x169] sm:$0xff]
        %v883 = vld [vmem:[#allocation2 + $0x171] sm:$0xff]
        %v884 = vld [vmem:[#allocation2 + $0x181] sm:$0xff]
        %v885 = vld [vmem:[#allocation2 + $0x189] sm:$0xff]
        %v886 = vld [vmem:[#allocation2 + $0x199] sm:$0xff]
        %v887 = vld [vmem:[#allocation2 + $0x1a1] sm:$0xff]
        %v888 = vperm.slane %v650, 1
        %v889 = vmul.f32 %v852, %v888
        %v890 = vmul.f32 %v853, %v888
        %v891 = vmul.f32 %v854, %v888
        %v892 = vmul.f32 %v855, %v888
        %v893 = vmul.f32 %v856, %v888
        %v894 = vmul.f32 %v857, %v888
        %v895 = vmul.f32 %v858, %v888
        %v896 = vmul.f32 %v859, %v888
        %v897 = vmul.f32 %v860, %v888
        %v898 = vmul.f32 %v861, %v888
        %v899 = vmul.f32 %v862, %v888
        %v900 = vmul.f32 %v863, %v888
        %v901 = vmul.f32 %v864, %v888
        %v902 = vmul.f32 %v865, %v888
        %v903 = vmul.f32 %v866, %v888
        %v904 = vmul.f32 %v867, %v888
        %v905 = vmul.f32 %v868, %v888
        %v906 = vmul.f32 %v869, %v888
        %v907 = vmul.f32 %v870, %v888
        %v908 = vmul.f32 %v871, %v888
        %v909 = vmul.f32 %v872, %v888
        %v910 = vmul.f32 %v873, %v888
        %v911 = vmul.f32 %v874, %v888
        %v912 = vmul.f32 %v875, %v888
        %v913 = vmul.f32 %v876, %v888
        %v914 = vmul.f32 %v877, %v888
        %v915 = vmul.f32 %v878, %v888
        %v916 = vmul.f32 %v879, %v888
        %v917 = vmul.f32 %v880, %v888
        %v918 = vmul.f32 %v881, %v888
        %v919 = vmul.f32 %v882, %v888
        %v920 = vmul.f32 %v883, %v888
        %v921 = vperm.slane %v651, 1
        %v922 = vmul.f32 %v854, %v921
        %v923 = vmul.f32 %v855, %v921
        %v924 = vmul.f32 %v856, %v921
        %v925 = vmul.f32 %v857, %v921
        %v926 = vmul.f32 %v858, %v921
        %v927 = vmul.f32 %v859, %v921
        %v928 = vmul.f32 %v860, %v921
        %v929 = vmul.f32 %v861, %v921
        %v930 = vmul.f32 %v862, %v921
        %v931 = vmul.f32 %v863, %v921
        %v932 = vmul.f32 %v864, %v921
        %v933 = vmul.f32 %v865, %v921
        %v934 = vmul.f32 %v866, %v921
        %v935 = vmul.f32 %v867, %v921
        %v936 = vmul.f32 %v868, %v921
        %v937 = vmul.f32 %v869, %v921
        %v938 = vmul.f32 %v870, %v921
        %v939 = vmul.f32 %v871, %v921
        %v940 = vmul.f32 %v872, %v921
        %v941 = vmul.f32 %v873, %v921
        %v942 = vmul.f32 %v874, %v921
        %v943 = vmul.f32 %v875, %v921
        %v944 = vmul.f32 %v876, %v921
        %v945 = vmul.f32 %v877, %v921
        %v946 = vmul.f32 %v878, %v921
        %v947 = vmul.f32 %v879, %v921
        %v948 = vmul.f32 %v880, %v921
        %v949 = vmul.f32 %v881, %v921
        %v950 = vmul.f32 %v882, %v921
        %v951 = vmul.f32 %v883, %v921
        %v952 = vmul.f32 %v884, %v921
        %v953 = vmul.f32 %v885, %v921
        %v954 = vadd.f32 %v889, %v922
        %v955 = vadd.f32 %v890, %v923
        %v956 = vadd.f32 %v891, %v924
        %v957 = vadd.f32 %v892, %v925
        %v958 = vadd.f32 %v893, %v926
        %v959 = vadd.f32 %v894, %v927
        %v960 = vadd.f32 %v895, %v928
        %v961 = vadd.f32 %v896, %v929
        %v962 = vadd.f32 %v897, %v930
        %v963 = vadd.f32 %v898, %v931
        %v964 = vadd.f32 %v899, %v932
        %v965 = vadd.f32 %v900, %v933
        %v966 = vadd.f32 %v901, %v934
        %v967 = vadd.f32 %v902, %v935
        %v968 = vadd.f32 %v903, %v936
        %v969 = vadd.f32 %v904, %v937
        %v970 = vadd.f32 %v905, %v938
        %v971 = vadd.f32 %v906, %v939
        %v972 = vadd.f32 %v907, %v940
        %v973 = vadd.f32 %v908, %v941
        %v974 = vadd.f32 %v909, %v942
        %v975 = vadd.f32 %v910, %v943
        %v976 = vadd.f32 %v911, %v944
        %v977 = vadd.f32 %v912, %v945
        %v978 = vadd.f32 %v913, %v946
        %v979 = vadd.f32 %v914, %v947
        %v980 = vadd.f32 %v915, %v948
        %v981 = vadd.f32 %v916, %v949
        %v982 = vadd.f32 %v917, %v950
        %v983 = vadd.f32 %v918, %v951
        %v984 = vadd.f32 %v919, %v952
        %v985 = vadd.f32 %v920, %v953
        %v986 = vperm.slane %v652, 1
        %v987 = vmul.f32 %v856, %v986
        %v988 = vmul.f32 %v857, %v986
        %v989 = vmul.f32 %v858, %v986
        %v990 = vmul.f32 %v859, %v986
        %v991 = vmul.f32 %v860, %v986
        %v992 = vmul.f32 %v861, %v986
        %v993 = vmul.f32 %v862, %v986
        %v994 = vmul.f32 %v863, %v986
        %v995 = vmul.f32 %v864, %v986
        %v996 = vmul.f32 %v865, %v986
        %v997 = vmul.f32 %v866, %v986
        %v998 = vmul.f32 %v867, %v986
        %v999 = vmul.f32 %v868, %v986
        %v1000 = vmul.f32 %v869, %v986
        %v1001 = vmul.f32 %v870, %v986
        %v1002 = vmul.f32 %v871, %v986
        %v1003 = vmul.f32 %v872, %v986
        %v1004 = vmul.f32 %v873, %v986
        %v1005 = vmul.f32 %v874, %v986
        %v1006 = vmul.f32 %v875, %v986
        %v1007 = vmul.f32 %v876, %v986
        %v1008 = vmul.f32 %v877, %v986
        %v1009 = vmul.f32 %v878, %v986
        %v1010 = vmul.f32 %v879, %v986
        %v1011 = vmul.f32 %v880, %v986
        %v1012 = vmul.f32 %v881, %v986
        %v1013 = vmul.f32 %v882, %v986
        %v1014 = vmul.f32 %v883, %v986
        %v1015 = vmul.f32 %v884, %v986
        %v1016 = vmul.f32 %v885, %v986
        %v1017 = vmul.f32 %v886, %v986
        %v1018 = vmul.f32 %v887, %v986
        %v1019 = vadd.f32 %v954, %v987
        %v1020 = vadd.f32 %v955, %v988
        %v1021 = vadd.f32 %v956, %v989
        %v1022 = vadd.f32 %v957, %v990
        %v1023 = vadd.f32 %v958, %v991
        %v1024 = vadd.f32 %v959, %v992
        %v1025 = vadd.f32 %v960, %v993
        %v1026 = vadd.f32 %v961, %v994
        %v1027 = vadd.f32 %v962, %v995
        %v1028 = vadd.f32 %v963, %v996
        %v1029 = vadd.f32 %v964, %v997
        %v1030 = vadd.f32 %v965, %v998
        %v1031 = vadd.f32 %v966, %v999
        %v1032 = vadd.f32 %v967, %v1000
        %v1033 = vadd.f32 %v968, %v1001
        %v1034 = vadd.f32 %v969, %v1002
        %v1035 = vadd.f32 %v970, %v1003
        %v1036 = vadd.f32 %v971, %v1004
        %v1037 = vadd.f32 %v972, %v1005
        %v1038 = vadd.f32 %v973, %v1006
        %v1039 = vadd.f32 %v974, %v1007
        %v1040 = vadd.f32 %v975, %v1008
        %v1041 = vadd.f32 %v976, %v1009
        %v1042 = vadd.f32 %v977, %v1010
        %v1043 = vadd.f32 %v978, %v1011
        %v1044 = vadd.f32 %v979, %v1012
        %v1045 = vadd.f32 %v980, %v1013
        %v1046 = vadd.f32 %v981, %v1014
        %v1047 = vadd.f32 %v982, %v1015
        %v1048 = vadd.f32 %v983, %v1016
        %v1049 = vadd.f32 %v984, %v1017
        %v1050 = vadd.f32 %v985, %v1018
        %v1051 = vld [vmem:[#allocation2 + $0x2] sm:$0xff]
        %v1052 = vld [vmem:[#allocation2 + $0xa] sm:$0xff]
        %v1053 = vld [vmem:[#allocation2 + $0x1a] sm:$0xff]
        %v1054 = vld [vmem:[#allocation2 + $0x22] sm:$0xff]
        %v1055 = vld [vmem:[#allocation2 + $0x32] sm:$0xff]
        %v1056 = vld [vmem:[#allocation2 + $0x3a] sm:$0xff]
        %v1057 = vld [vmem:[#allocation2 + $0x4a] sm:$0xff]
        %v1058 = vld [vmem:[#allocation2 + $0x52] sm:$0xff]
        %v1059 = vld [vmem:[#allocation2 + $0x62] sm:$0xff]
        %v1060 = vld [vmem:[#allocation2 + $0x6a] sm:$0xff]
        %v1061 = vld [vmem:[#allocation2 + $0x7a] sm:$0xff]
        %v1062 = vld [vmem:[#allocation2 + $0x82] sm:$0xff]
        %v1063 = vld [vmem:[#allocation2 + $0x92] sm:$0xff]
        %v1064 = vld [vmem:[#allocation2 + $0x9a] sm:$0xff]
        %v1065 = vld [vmem:[#allocation2 + $0xaa] sm:$0xff]
        %v1066 = vld [vmem:[#allocation2 + $0xb2] sm:$0xff]
        %v1067 = vld [vmem:[#allocation2 + $0xc2] sm:$0xff]
        %v1068 = vld [vmem:[#allocation2 + $0xca] sm:$0xff]
        %v1069 = vld [vmem:[#allocation2 + $0xda] sm:$0xff]
        %v1070 = vld [vmem:[#allocation2 + $0xe2] sm:$0xff]
        %v1071 = vld [vmem:[#allocation2 + $0xf2] sm:$0xff]
        %v1072 = vld [vmem:[#allocation2 + $0xfa] sm:$0xff]
        %v1073 = vld [vmem:[#allocation2 + $0x10a] sm:$0xff]
        %v1074 = vld [vmem:[#allocation2 + $0x112] sm:$0xff]
        %v1075 = vld [vmem:[#allocation2 + $0x122] sm:$0xff]
        %v1076 = vld [vmem:[#allocation2 + $0x12a] sm:$0xff]
        %v1077 = vld [vmem:[#allocation2 + $0x13a] sm:$0xff]
        %v1078 = vld [vmem:[#allocation2 + $0x142] sm:$0xff]
        %v1079 = vld [vmem:[#allocation2 + $0x152] sm:$0xff]
        %v1080 = vld [vmem:[#allocation2 + $0x15a] sm:$0xff]
        %v1081 = vld [vmem:[#allocation2 + $0x16a] sm:$0xff]
        %v1082 = vld [vmem:[#allocation2 + $0x172] sm:$0xff]
        %v1083 = vld [vmem:[#allocation2 + $0x182] sm:$0xff]
        %v1084 = vld [vmem:[#allocation2 + $0x18a] sm:$0xff]
        %v1085 = vld [vmem:[#allocation2 + $0x19a] sm:$0xff]
        %v1086 = vld [vmem:[#allocation2 + $0x1a2] sm:$0xff]
        %v1087 = vperm.slane %v650, 2
        %v1088 = vmul.f32 %v1051, %v1087
        %v1089 = vmul.f32 %v1052, %v1087
        %v1090 = vmul.f32 %v1053, %v1087
        %v1091 = vmul.f32 %v1054, %v1087
        %v1092 = vmul.f32 %v1055, %v1087
        %v1093 = vmul.f32 %v1056, %v1087
        %v1094 = vmul.f32 %v1057, %v1087
        %v1095 = vmul.f32 %v1058, %v1087
        %v1096 = vmul.f32 %v1059, %v1087
        %v1097 = vmul.f32 %v1060, %v1087
        %v1098 = vmul.f32 %v1061, %v1087
        %v1099 = vmul.f32 %v1062, %v1087
        %v1100 = vmul.f32 %v1063, %v1087
        %v1101 = vmul.f32 %v1064, %v1087
        %v1102 = vmul.f32 %v1065, %v1087
        %v1103 = vmul.f32 %v1066, %v1087
        %v1104 = vmul.f32 %v1067, %v1087
        %v1105 = vmul.f32 %v1068, %v1087
        %v1106 = vmul.f32 %v1069, %v1087
        %v1107 = vmul.f32 %v1070, %v1087
        %v1108 = vmul.f32 %v1071, %v1087
        %v1109 = vmul.f32 %v1072, %v1087
        %v1110 = vmul.f32 %v1073, %v1087
        %v1111 = vmul.f32 %v1074, %v1087
        %v1112 = vmul.f32 %v1075, %v1087
        %v1113 = vmul.f32 %v1076, %v1087
        %v1114 = vmul.f32 %v1077, %v1087
        %v1115 = vmul.f32 %v1078, %v1087
        %v1116 = vmul.f32 %v1079, %v1087
        %v1117 = vmul.f32 %v1080, %v1087
        %v1118 = vmul.f32 %v1081, %v1087
        %v1119 = vmul.f32 %v1082, %v1087
        %v1120 = vperm.slane %v651, 2
        %v1121 = vmul.f32 %v1053, %v1120
        %v1122 = vmul.f32 %v1054, %v1120
        %v1123 = vmul.f32 %v1055, %v1120
        %v1124 = vmul.f32 %v1056, %v1120
        %v1125 = vmul.f32 %v1057, %v1120
        %v1126 = vmul.f32 %v1058, %v1120
        %v1127 = vmul.f32 %v1059, %v1120
        %v1128 = vmul.f32 %v1060, %v1120
        %v1129 = vmul.f32 %v1061, %v1120
        %v1130 = vmul.f32 %v1062, %v1120
        %v1131 = vmul.f32 %v1063, %v1120
        %v1132 = vmul.f32 %v1064, %v1120
        %v1133 = vmul.f32 %v1065, %v1120
        %v1134 = vmul.f32 %v1066, %v1120
        %v1135 = vmul.f32 %v1067, %v1120
        %v1136 = vmul.f32 %v1068, %v1120
        %v1137 = vmul.f32 %v1069, %v1120
        %v1138 = vmul.f32 %v1070, %v1120
        %v1139 = vmul.f32 %v1071, %v1120
        %v1140 = vmul.f32 %v1072, %v1120
        %v1141 = vmul.f32 %v1073, %v1120
        %v1142 = vmul.f32 %v1074, %v1120
        %v1143 = vmul.f32 %v1075, %v1120
        %v1144 = vmul.f32 %v1076, %v1120
        %v1145 = vmul.f32 %v1077, %v1120
        %v1146 = vmul.f32 %v1078, %v1120
        %v1147 = vmul.f32 %v1079, %v1120
        %v1148 = vmul.f32 %v1080, %v1120
        %v1149 = vmul.f32 %v1081, %v1120
        %v1150 = vmul.f32 %v1082, %v1120
        %v1151 = vmul.f32 %v1083, %v1120
        %v1152 = vmul.f32 %v1084, %v1120
        %v1153 = vadd.f32 %v1088, %v1121
        %v1154 = vadd.f32 %v1089, %v1122
        %v1155 = vadd.f32 %v1090, %v1123
        %v1156 = vadd.f32 %v1091, %v1124
        %v1157 = vadd.f32 %v1092, %v1125
        %v1158 = vadd.f32 %v1093, %v1126
        %v1159 = vadd.f32 %v1094, %v1127
        %v1160 = vadd.f32 %v1095, %v1128
        %v1161 = vadd.f32 %v1096, %v1129
        %v1162 = vadd.f32 %v1097, %v1130
        %v1163 = vadd.f32 %v1098, %v1131
        %v1164 = vadd.f32 %v1099, %v1132
        %v1165 = vadd.f32 %v1100, %v1133
        %v1166 = vadd.f32 %v1101, %v1134
        %v1167 = vadd.f32 %v1102, %v1135
        %v1168 = vadd.f32 %v1103, %v1136
        %v1169 = vadd.f32 %v1104, %v1137
        %v1170 = vadd.f32 %v1105, %v1138
        %v1171 = vadd.f32 %v1106, %v1139
        %v1172 = vadd.f32 %v1107, %v1140
        %v1173 = vadd.f32 %v1108, %v1141
        %v1174 = vadd.f32 %v1109, %v1142
        %v1175 = vadd.f32 %v1110, %v1143
        %v1176 = vadd.f32 %v1111, %v1144
        %v1177 = vadd.f32 %v1112, %v1145
        %v1178 = vadd.f32 %v1113, %v1146
        %v1179 = vadd.f32 %v1114, %v1147
        %v1180 = vadd.f32 %v1115, %v1148
        %v1181 = vadd.f32 %v1116, %v1149
        %v1182 = vadd.f32 %v1117, %v1150
        %v1183 = vadd.f32 %v1118, %v1151
        %v1184 = vadd.f32 %v1119, %v1152
        %v1185 = vperm.slane %v652, 2
        %v1186 = vmul.f32 %v1055, %v1185
        %v1187 = vmul.f32 %v1056, %v1185
        %v1188 = vmul.f32 %v1057, %v1185
        %v1189 = vmul.f32 %v1058, %v1185
        %v1190 = vmul.f32 %v1059, %v1185
        %v1191 = vmul.f32 %v1060, %v1185
        %v1192 = vmul.f32 %v1061, %v1185
        %v1193 = vmul.f32 %v1062, %v1185
        %v1194 = vmul.f32 %v1063, %v1185
        %v1195 = vmul.f32 %v1064, %v1185
        %v1196 = vmul.f32 %v1065, %v1185
        %v1197 = vmul.f32 %v1066, %v1185
        %v1198 = vmul.f32 %v1067, %v1185
        %v1199 = vmul.f32 %v1068, %v1185
        %v1200 = vmul.f32 %v1069, %v1185
        %v1201 = vmul.f32 %v1070, %v1185
        %v1202 = vmul.f32 %v1071, %v1185
        %v1203 = vmul.f32 %v1072, %v1185
        %v1204 = vmul.f32 %v1073, %v1185
        %v1205 = vmul.f32 %v1074, %v1185
        %v1206 = vmul.f32 %v1075, %v1185
        %v1207 = vmul.f32 %v1076, %v1185
        %v1208 = vmul.f32 %v1077, %v1185
        %v1209 = vmul.f32 %v1078, %v1185
        %v1210 = vmul.f32 %v1079, %v1185
        %v1211 = vmul.f32 %v1080, %v1185
        %v1212 = vmul.f32 %v1081, %v1185
        %v1213 = vmul.f32 %v1082, %v1185
        %v1214 = vmul.f32 %v1083, %v1185
        %v1215 = vmul.f32 %v1084, %v1185
        %v1216 = vmul.f32 %v1085, %v1185
        %v1217 = vmul.f32 %v1086, %v1185
        %v1218 = vadd.f32 %v1153, %v1186
        %v1219 = vadd.f32 %v1154, %v1187
        %v1220 = vadd.f32 %v1155, %v1188
        %v1221 = vadd.f32 %v1156, %v1189
        %v1222 = vadd.f32 %v1157, %v1190
        %v1223 = vadd.f32 %v1158, %v1191
        %v1224 = vadd.f32 %v1159, %v1192
        %v1225 = vadd.f32 %v1160, %v1193
        %v1226 = vadd.f32 %v1161, %v1194
        %v1227 = vadd.f32 %v1162, %v1195
        %v1228 = vadd.f32 %v1163, %v1196
        %v1229 = vadd.f32 %v1164, %v1197
        %v1230 = vadd.f32 %v1165, %v1198
        %v1231 = vadd.f32 %v1166, %v1199
        %v1232 = vadd.f32 %v1167, %v1200
        %v1233 = vadd.f32 %v1168, %v1201
        %v1234 = vadd.f32 %v1169, %v1202
        %v1235 = vadd.f32 %v1170, %v1203
        %v1236 = vadd.f32 %v1171, %v1204
        %v1237 = vadd.f32 %v1172, %v1205
        %v1238 = vadd.f32 %v1173, %v1206
        %v1239 = vadd.f32 %v1174, %v1207
        %v1240 = vadd.f32 %v1175, %v1208
        %v1241 = vadd.f32 %v1176, %v1209
        %v1242 = vadd.f32 %v1177, %v1210
        %v1243 = vadd.f32 %v1178, %v1211
        %v1244 = vadd.f32 %v1179, %v1212
        %v1245 = vadd.f32 %v1180, %v1213
        %v1246 = vadd.f32 %v1181, %v1214
        %v1247 = vadd.f32 %v1182, %v1215
        %v1248 = vadd.f32 %v1183, %v1216
        %v1249 = vadd.f32 %v1184, %v1217
        %v1250 = vadd.f32 %v820, %v1019
        %v1251 = vadd.f32 %v821, %v1020
        %v1252 = vadd.f32 %v822, %v1021
        %v1253 = vadd.f32 %v823, %v1022
        %v1254 = vadd.f32 %v824, %v1023
        %v1255 = vadd.f32 %v825, %v1024
        %v1256 = vadd.f32 %v826, %v1025
        %v1257 = vadd.f32 %v827, %v1026
        %v1258 = vadd.f32 %v828, %v1027
        %v1259 = vadd.f32 %v829, %v1028
        %v1260 = vadd.f32 %v830, %v1029
        %v1261 = vadd.f32 %v831, %v1030
        %v1262 = vadd.f32 %v832, %v1031
        %v1263 = vadd.f32 %v833, %v1032
        %v1264 = vadd.f32 %v834, %v1033
        %v1265 = vadd.f32 %v835, %v1034
        %v1266 = vadd.f32 %v836, %v1035
        %v1267 = vadd.f32 %v837, %v1036
        %v1268 = vadd.f32 %v838, %v1037
        %v1269 = vadd.f32 %v839, %v1038
        %v1270 = vadd.f32 %v840, %v1039
        %v1271 = vadd.f32 %v841, %v1040
        %v1272 = vadd.f32 %v842, %v1041
        %v1273 = vadd.f32 %v843, %v1042
        %v1274 = vadd.f32 %v844, %v1043
        %v1275 = vadd.f32 %v845, %v1044
        %v1276 = vadd.f32 %v846, %v1045
        %v1277 = vadd.f32 %v847, %v1046
        %v1278 = vadd.f32 %v848, %v1047
        %v1279 = vadd.f32 %v849, %v1048
        %v1280 = vadd.f32 %v850, %v1049
        %v1281 = vadd.f32 %v851, %v1050
        %v1282 = vadd.f32 %v1250, %v1218
        %v1283 = vadd.f32 %v1251, %v1219
        %v1284 = vadd.f32 %v1252, %v1220
        %v1285 = vadd.f32 %v1253, %v1221
        %v1286 = vadd.f32 %v1254, %v1222
        %v1287 = vadd.f32 %v1255, %v1223
        %v1288 = vadd.f32 %v1256, %v1224
        %v1289 = vadd.f32 %v1257, %v1225
        %v1290 = vadd.f32 %v1258, %v1226
        %v1291 = vadd.f32 %v1259, %v1227
        %v1292 = vadd.f32 %v1260, %v1228
        %v1293 = vadd.f32 %v1261, %v1229
        %v1294 = vadd.f32 %v1262, %v1230
        %v1295 = vadd.f32 %v1263, %v1231
        %v1296 = vadd.f32 %v1264, %v1232
        %v1297 = vadd.f32 %v1265, %v1233
        %v1298 = vadd.f32 %v1266, %v1234
        %v1299 = vadd.f32 %v1267, %v1235
        %v1300 = vadd.f32 %v1268, %v1236
        %v1301 = vadd.f32 %v1269, %v1237
        %v1302 = vadd.f32 %v1270, %v1238
        %v1303 = vadd.f32 %v1271, %v1239
        %v1304 = vadd.f32 %v1272, %v1240
        %v1305 = vadd.f32 %v1273, %v1241
        %v1306 = vadd.f32 %v1274, %v1242
        %v1307 = vadd.f32 %v1275, %v1243
        %v1308 = vadd.f32 %v1276, %v1244
        %v1309 = vadd.f32 %v1277, %v1245
        %v1310 = vadd.f32 %v1278, %v1246
        %v1311 = vadd.f32 %v1279, %v1247
        %v1312 = vadd.f32 %v1280, %v1248
        %v1313 = vadd.f32 %v1281, %v1249
        %v1314 = vld [vmem:[%s5] sm:$0xff]
        %v1315 = vld [vmem:[%s6] sm:$0x1]
        %v1317 = vperm.slane %v1315, 0
        %v1320 = vsel %vm334, %v1282, 0
        %v1323 = vsel %vm334, %v1283, 0
        %v1326 = vsel %vm334, %v1284, 0
        %v1329 = vsel %vm334, %v1285, 0
        %v1332 = vsel %vm334, %v1286, 0
        %v1335 = vsel %vm334, %v1287, 0
        %v1338 = vsel %vm334, %v1288, 0
        %v1341 = vsel %vm334, %v1289, 0
        %v1344 = vsel %vm334, %v1290, 0
        %v1347 = vsel %vm334, %v1291, 0
        %v1350 = vsel %vm334, %v1292, 0
        %v1353 = vsel %vm334, %v1293, 0
        %v1356 = vsel %vm334, %v1294, 0
        %v1359 = vsel %vm334, %v1295, 0
        %v1362 = vsel %vm334, %v1296, 0
        %v1365 = vsel %vm334, %v1297, 0
        %v1368 = vsel %vm334, %v1298, 0
        %v1371 = vsel %vm334, %v1299, 0
        %v1374 = vsel %vm334, %v1300, 0
        %v1377 = vsel %vm334, %v1301, 0
        %v1380 = vsel %vm334, %v1302, 0
        %v1383 = vsel %vm334, %v1303, 0
        %v1386 = vsel %vm334, %v1304, 0
        %v1389 = vsel %vm334, %v1305, 0
        %v1392 = vsel %vm334, %v1306, 0
        %v1395 = vsel %vm334, %v1307, 0
        %v1398 = vsel %vm334, %v1308, 0
        %v1401 = vsel %vm334, %v1309, 0
        %v1404 = vsel %vm334, %v1310, 0
        %v1407 = vsel %vm334, %v1311, 0
        %v1410 = vsel %vm334, %v1312, 0
        %v1413 = vsel %vm334, %v1313, 0
        %1415 = vmatpush.msra.mxu0 0.0
        %1416 = vmatpush.msra.mxu0 0.0
        %1417 = vmatpush.msra.mxu0 0.0
        %1418 = vmatpush.msra.mxu0 0.0
        %1419 = vmatpush.msra.mxu0 0.0
        %1420 = vmatpush.msra.mxu0 0.0
        %1421 = vmatpush.msra.mxu0 0.0
        %1422 = vmatpush.msra.mxu0 0.0
        %1423 = vmatpush.msra.mxu0 0.0
        %1424 = vmatpush.msra.mxu0 0.0
        %1425 = vmatpush.msra.mxu0 0.0
        %1426 = vmatpush.msra.mxu0 0.0
        %1427 = vmatpush.msra.mxu0 0.0
        %1428 = vmatpush.msra.mxu0 0.0
        %1429 = vmatpush.msra.mxu0 0.0
        %1430 = vmatpush.msra.mxu0 %v1314
        %1431 = vmatmul.f32.gmra.mxu0 %v1320
        %v1432 = vpop.f32.mrf.mxu0
        %v1433 = vadd.f32 %v1317, %v1432
        %1434 = vmatmul.f32.gmra.mxu0 %v1323
        %v1435 = vpop.f32.mrf.mxu0
        %v1436 = vadd.f32 %v1317, %v1435
        %1437 = vmatmul.f32.gmra.mxu0 %v1326
        %v1438 = vpop.f32.mrf.mxu0
        %v1439 = vadd.f32 %v1317, %v1438
        %1440 = vmatmul.f32.gmra.mxu0 %v1329
        %v1441 = vpop.f32.mrf.mxu0
        %v1442 = vadd.f32 %v1317, %v1441
        %1443 = vmatmul.f32.gmra.mxu0 %v1332
        %v1444 = vpop.f32.mrf.mxu0
        %v1445 = vadd.f32 %v1317, %v1444
        %1446 = vmatmul.f32.gmra.mxu0 %v1335
        %v1447 = vpop.f32.mrf.mxu0
        %v1448 = vadd.f32 %v1317, %v1447
        %1449 = vmatmul.f32.gmra.mxu0 %v1338
        %v1450 = vpop.f32.mrf.mxu0
        %v1451 = vadd.f32 %v1317, %v1450
        %1452 = vmatmul.f32.gmra.mxu0 %v1341
        %v1453 = vpop.f32.mrf.mxu0
        %v1454 = vadd.f32 %v1317, %v1453
        %1455 = vmatmul.f32.gmra.mxu0 %v1344
        %v1456 = vpop.f32.mrf.mxu0
        %v1457 = vadd.f32 %v1317, %v1456
        %1458 = vmatmul.f32.gmra.mxu0 %v1347
        %v1459 = vpop.f32.mrf.mxu0
        %v1460 = vadd.f32 %v1317, %v1459
        %1461 = vmatmul.f32.gmra.mxu0 %v1350
        %v1462 = vpop.f32.mrf.mxu0
        %v1463 = vadd.f32 %v1317, %v1462
        %1464 = vmatmul.f32.gmra.mxu0 %v1353
        %v1465 = vpop.f32.mrf.mxu0
        %v1466 = vadd.f32 %v1317, %v1465
        %1467 = vmatmul.f32.gmra.mxu0 %v1356
        %v1468 = vpop.f32.mrf.mxu0
        %v1469 = vadd.f32 %v1317, %v1468
        %1470 = vmatmul.f32.gmra.mxu0 %v1359
        %v1471 = vpop.f32.mrf.mxu0
        %v1472 = vadd.f32 %v1317, %v1471
        %1473 = vmatmul.f32.gmra.mxu0 %v1362
        %v1474 = vpop.f32.mrf.mxu0
        %v1475 = vadd.f32 %v1317, %v1474
        %1476 = vmatmul.f32.gmra.mxu0 %v1365
        %v1477 = vpop.f32.mrf.mxu0
        %v1478 = vadd.f32 %v1317, %v1477
        %1479 = vmatmul.f32.gmra.mxu0 %v1368
        %v1480 = vpop.f32.mrf.mxu0
        %v1481 = vadd.f32 %v1317, %v1480
        %1482 = vmatmul.f32.gmra.mxu0 %v1371
        %v1483 = vpop.f32.mrf.mxu0
        %v1484 = vadd.f32 %v1317, %v1483
        %1485 = vmatmul.f32.gmra.mxu0 %v1374
        %v1486 = vpop.f32.mrf.mxu0
        %v1487 = vadd.f32 %v1317, %v1486
        %1488 = vmatmul.f32.gmra.mxu0 %v1377
        %v1489 = vpop.f32.mrf.mxu0
        %v1490 = vadd.f32 %v1317, %v1489
        %1491 = vmatmul.f32.gmra.mxu0 %v1380
        %v1492 = vpop.f32.mrf.mxu0
        %v1493 = vadd.f32 %v1317, %v1492
        %1494 = vmatmul.f32.gmra.mxu0 %v1383
        %v1495 = vpop.f32.mrf.mxu0
        %v1496 = vadd.f32 %v1317, %v1495
        %1497 = vmatmul.f32.gmra.mxu0 %v1386
        %v1498 = vpop.f32.mrf.mxu0
        %v1499 = vadd.f32 %v1317, %v1498
        %1500 = vmatmul.f32.gmra.mxu0 %v1389
        %v1501 = vpop.f32.mrf.mxu0
        %v1502 = vadd.f32 %v1317, %v1501
        %1503 = vmatmul.f32.gmra.mxu0 %v1392
        %v1504 = vpop.f32.mrf.mxu0
        %v1505 = vadd.f32 %v1317, %v1504
        %1506 = vmatmul.f32.gmra.mxu0 %v1395
        %v1507 = vpop.f32.mrf.mxu0
        %v1508 = vadd.f32 %v1317, %v1507
        %1509 = vmatmul.f32.gmra.mxu0 %v1398
        %v1510 = vpop.f32.mrf.mxu0
        %v1511 = vadd.f32 %v1317, %v1510
        %1512 = vmatmul.f32.gmra.mxu0 %v1401
        %v1513 = vpop.f32.mrf.mxu0
        %v1514 = vadd.f32 %v1317, %v1513
        %1515 = vmatmul.f32.gmra.mxu0 %v1404
        %v1516 = vpop.f32.mrf.mxu0
        %v1517 = vadd.f32 %v1317, %v1516
        %1518 = vmatmul.f32.gmra.mxu0 %v1407
        %v1519 = vpop.f32.mrf.mxu0
        %v1520 = vadd.f32 %v1317, %v1519
        %1521 = vmatmul.f32.gmra.mxu0 %v1410
        %v1522 = vpop.f32.mrf.mxu0
        %v1523 = vadd.f32 %v1317, %v1522
        %1524 = vmatmul.f32.gmra.mxu0 %v1413
        %v1525 = vpop.f32.mrf.mxu0
        %v1526 = vadd.f32 %v1317, %v1525
        %1527 = vdwg.mxu0
        %v1528 = vmax.f32 %v1433, 0.0
        %v1529 = vmax.f32 %v1436, 0.0
        %v1530 = vmax.f32 %v1439, 0.0
        %v1531 = vmax.f32 %v1442, 0.0
        %v1532 = vmax.f32 %v1445, 0.0
        %v1533 = vmax.f32 %v1448, 0.0
        %v1534 = vmax.f32 %v1451, 0.0
        %v1535 = vmax.f32 %v1454, 0.0
        %v1536 = vmax.f32 %v1457, 0.0
        %v1537 = vmax.f32 %v1460, 0.0
        %v1538 = vmax.f32 %v1463, 0.0
        %v1539 = vmax.f32 %v1466, 0.0
        %v1540 = vmax.f32 %v1469, 0.0
        %v1541 = vmax.f32 %v1472, 0.0
        %v1542 = vmax.f32 %v1475, 0.0
        %v1543 = vmax.f32 %v1478, 0.0
        %v1544 = vmax.f32 %v1481, 0.0
        %v1545 = vmax.f32 %v1484, 0.0
        %v1546 = vmax.f32 %v1487, 0.0
        %v1547 = vmax.f32 %v1490, 0.0
        %v1548 = vmax.f32 %v1493, 0.0
        %v1549 = vmax.f32 %v1496, 0.0
        %v1550 = vmax.f32 %v1499, 0.0
        %v1551 = vmax.f32 %v1502, 0.0
        %v1552 = vmax.f32 %v1505, 0.0
        %v1553 = vmax.f32 %v1508, 0.0
        %v1554 = vmax.f32 %v1511, 0.0
        %v1555 = vmax.f32 %v1514, 0.0
        %v1556 = vmax.f32 %v1517, 0.0
        %v1557 = vmax.f32 %v1520, 0.0
        %v1558 = vmax.f32 %v1523, 0.0
        %v1559 = vmax.f32 %v1526, 0.0
        %v1560 = vld [vmem:[%s291] sm:$0xff]
        %v1561 = vld [vmem:[%s291 + $0x8] sm:$0xff]
        %v1562 = vld [vmem:[%s291 + $0x10] sm:$0xff]
        %v1563 = vld [vmem:[%s291 + $0x18] sm:$0xff]
        %v1564 = vld [vmem:[%s291 + $0x20] sm:$0xff]
        %v1565 = vld [vmem:[%s291 + $0x28] sm:$0xff]
        %v1566 = vld [vmem:[%s291 + $0x30] sm:$0xff]
        %v1567 = vld [vmem:[%s291 + $0x38] sm:$0xff]
        %v1568 = vld [vmem:[%s291 + $0x40] sm:$0xff]
        %v1569 = vld [vmem:[%s291 + $0x48] sm:$0xff]
        %v1570 = vld [vmem:[%s291 + $0x50] sm:$0xff]
        %v1571 = vld [vmem:[%s291 + $0x58] sm:$0xff]
        %v1572 = vld [vmem:[%s291 + $0x60] sm:$0xff]
        %v1573 = vld [vmem:[%s291 + $0x68] sm:$0xff]
        %v1574 = vld [vmem:[%s291 + $0x70] sm:$0xff]
        %v1575 = vld [vmem:[%s291 + $0x78] sm:$0xff]
        %v1576 = vld [vmem:[%s291 + $0x80] sm:$0xff]
        %v1577 = vld [vmem:[%s291 + $0x88] sm:$0xff]
        %v1578 = vld [vmem:[%s291 + $0x90] sm:$0xff]
        %v1579 = vld [vmem:[%s291 + $0x98] sm:$0xff]
        %v1580 = vld [vmem:[%s291 + $0xa0] sm:$0xff]
        %v1581 = vld [vmem:[%s291 + $0xa8] sm:$0xff]
        %v1582 = vld [vmem:[%s291 + $0xb0] sm:$0xff]
        %v1583 = vld [vmem:[%s291 + $0xb8] sm:$0xff]
        %v1584 = vld [vmem:[%s291 + $0xc0] sm:$0xff]
        %v1585 = vld [vmem:[%s291 + $0xc8] sm:$0xff]
        %v1586 = vld [vmem:[%s291 + $0xd0] sm:$0xff]
        %v1587 = vld [vmem:[%s291 + $0xd8] sm:$0xff]
        %v1588 = vld [vmem:[%s291 + $0xe0] sm:$0xff]
        %v1589 = vld [vmem:[%s291 + $0xe8] sm:$0xff]
        %v1590 = vld [vmem:[%s291 + $0xf0] sm:$0xff]
        %v1591 = vld [vmem:[%s291 + $0xf8] sm:$0xff]
        %1592 = vst.msk [vmem:[%s286] sm:$0xff] %vm334, %v1560
        %1593 = vst.msk [vmem:[%s286 + $0x8] sm:$0xff] %vm334, %v1561
        %1594 = vst.msk [vmem:[%s286 + $0x10] sm:$0xff] %vm334, %v1562
        %1595 = vst.msk [vmem:[%s286 + $0x18] sm:$0xff] %vm334, %v1563
        %1596 = vst.msk [vmem:[%s286 + $0x20] sm:$0xff] %vm334, %v1564
        %1597 = vst.msk [vmem:[%s286 + $0x28] sm:$0xff] %vm334, %v1565
        %1598 = vst.msk [vmem:[%s286 + $0x30] sm:$0xff] %vm334, %v1566
        %1599 = vst.msk [vmem:[%s286 + $0x38] sm:$0xff] %vm334, %v1567
        %1600 = vst.msk [vmem:[%s286 + $0x40] sm:$0xff] %vm334, %v1568
        %1601 = vst.msk [vmem:[%s286 + $0x48] sm:$0xff] %vm334, %v1569
        %1602 = vst.msk [vmem:[%s286 + $0x50] sm:$0xff] %vm334, %v1570
        %1603 = vst.msk [vmem:[%s286 + $0x58] sm:$0xff] %vm334, %v1571
        %1604 = vst.msk [vmem:[%s286 + $0x60] sm:$0xff] %vm334, %v1572
        %1605 = vst.msk [vmem:[%s286 + $0x68] sm:$0xff] %vm334, %v1573
        %1606 = vst.msk [vmem:[%s286 + $0x70] sm:$0xff] %vm334, %v1574
        %1607 = vst.msk [vmem:[%s286 + $0x78] sm:$0xff] %vm334, %v1575
        %1608 = vst.msk [vmem:[%s286 + $0x80] sm:$0xff] %vm334, %v1576
        %1609 = vst.msk [vmem:[%s286 + $0x88] sm:$0xff] %vm334, %v1577
        %1610 = vst.msk [vmem:[%s286 + $0x90] sm:$0xff] %vm334, %v1578
        %1611 = vst.msk [vmem:[%s286 + $0x98] sm:$0xff] %vm334, %v1579
        %1612 = vst.msk [vmem:[%s286 + $0xa0] sm:$0xff] %vm334, %v1580
        %1613 = vst.msk [vmem:[%s286 + $0xa8] sm:$0xff] %vm334, %v1581
        %1614 = vst.msk [vmem:[%s286 + $0xb0] sm:$0xff] %vm334, %v1582
        %1615 = vst.msk [vmem:[%s286 + $0xb8] sm:$0xff] %vm334, %v1583
        %1616 = vst.msk [vmem:[%s286 + $0xc0] sm:$0xff] %vm334, %v1584
        %1617 = vst.msk [vmem:[%s286 + $0xc8] sm:$0xff] %vm334, %v1585
        %1618 = vst.msk [vmem:[%s286 + $0xd0] sm:$0xff] %vm334, %v1586
        %1619 = vst.msk [vmem:[%s286 + $0xd8] sm:$0xff] %vm334, %v1587
        %1620 = vst.msk [vmem:[%s286 + $0xe0] sm:$0xff] %vm334, %v1588
        %1621 = vst.msk [vmem:[%s286 + $0xe8] sm:$0xff] %vm334, %v1589
        %1622 = vst.msk [vmem:[%s286 + $0xf0] sm:$0xff] %vm334, %v1590
        %1623 = vst.msk [vmem:[%s286 + $0xf8] sm:$0xff] %vm334, %v1591
        %1656 = vrot.lane.b32.xlu0 %v1528, 8
        %v1657 = vpop.permute.xlu0 %1656
        %1658 = vrot.lane.b32.xlu0 %v1529, 8
        %v1659 = vpop.permute.xlu0 %1658
        %1660 = vrot.lane.b32.xlu0 %v1530, 8
        %v1661 = vpop.permute.xlu0 %1660
        %1662 = vrot.lane.b32.xlu0 %v1531, 8
        %v1663 = vpop.permute.xlu0 %1662
        %1664 = vrot.lane.b32.xlu0 %v1532, 8
        %v1665 = vpop.permute.xlu0 %1664
        %1666 = vrot.lane.b32.xlu0 %v1533, 8
        %v1667 = vpop.permute.xlu0 %1666
        %1668 = vrot.lane.b32.xlu0 %v1534, 8
        %v1669 = vpop.permute.xlu0 %1668
        %1670 = vrot.lane.b32.xlu0 %v1535, 8
        %v1671 = vpop.permute.xlu0 %1670
        %1672 = vrot.lane.b32.xlu0 %v1536, 8
        %v1673 = vpop.permute.xlu0 %1672
        %1674 = vrot.lane.b32.xlu0 %v1537, 8
        %v1675 = vpop.permute.xlu0 %1674
        %1676 = vrot.lane.b32.xlu0 %v1538, 8
        %v1677 = vpop.permute.xlu0 %1676
        %1678 = vrot.lane.b32.xlu0 %v1539, 8
        %v1679 = vpop.permute.xlu0 %1678
        %1680 = vrot.lane.b32.xlu0 %v1540, 8
        %v1681 = vpop.permute.xlu0 %1680
        %1682 = vrot.lane.b32.xlu0 %v1541, 8
        %v1683 = vpop.permute.xlu0 %1682
        %1684 = vrot.lane.b32.xlu0 %v1542, 8
        %v1685 = vpop.permute.xlu0 %1684
        %1686 = vrot.lane.b32.xlu0 %v1543, 8
        %v1687 = vpop.permute.xlu0 %1686
        %1688 = vrot.lane.b32.xlu0 %v1544, 8
        %v1689 = vpop.permute.xlu0 %1688
        %1690 = vrot.lane.b32.xlu0 %v1545, 8
        %v1691 = vpop.permute.xlu0 %1690
        %1692 = vrot.lane.b32.xlu0 %v1546, 8
        %v1693 = vpop.permute.xlu0 %1692
        %1694 = vrot.lane.b32.xlu0 %v1547, 8
        %v1695 = vpop.permute.xlu0 %1694
        %1696 = vrot.lane.b32.xlu0 %v1548, 8
        %v1697 = vpop.permute.xlu0 %1696
        %1698 = vrot.lane.b32.xlu0 %v1549, 8
        %v1699 = vpop.permute.xlu0 %1698
        %1700 = vrot.lane.b32.xlu0 %v1550, 8
        %v1701 = vpop.permute.xlu0 %1700
        %1702 = vrot.lane.b32.xlu0 %v1551, 8
        %v1703 = vpop.permute.xlu0 %1702
        %1704 = vrot.lane.b32.xlu0 %v1552, 8
        %v1705 = vpop.permute.xlu0 %1704
        %1706 = vrot.lane.b32.xlu0 %v1553, 8
        %v1707 = vpop.permute.xlu0 %1706
        %1708 = vrot.lane.b32.xlu0 %v1554, 8
        %v1709 = vpop.permute.xlu0 %1708
        %1710 = vrot.lane.b32.xlu0 %v1555, 8
        %v1711 = vpop.permute.xlu0 %1710
        %1712 = vrot.lane.b32.xlu0 %v1556, 8
        %v1713 = vpop.permute.xlu0 %1712
        %1714 = vrot.lane.b32.xlu0 %v1557, 8
        %v1715 = vpop.permute.xlu0 %1714
        %1716 = vrot.lane.b32.xlu0 %v1558, 8
        %v1717 = vpop.permute.xlu0 %1716
        %1718 = vrot.lane.b32.xlu0 %v1559, 8
        %v1719 = vpop.permute.xlu0 %1718
        %vm1752 = vcmask 130112
        %1753 = vst.msk [vmem:[%s286] sm:$0xff] %vm1752, %v1657
        %1754 = vst.msk [vmem:[%s286 + $0x8] sm:$0xff] %vm1752, %v1659
        %1755 = vst.msk [vmem:[%s286 + $0x10] sm:$0xff] %vm1752, %v1661
        %1756 = vst.msk [vmem:[%s286 + $0x18] sm:$0xff] %vm1752, %v1663
        %1757 = vst.msk [vmem:[%s286 + $0x20] sm:$0xff] %vm1752, %v1665
        %1758 = vst.msk [vmem:[%s286 + $0x28] sm:$0xff] %vm1752, %v1667
        %1759 = vst.msk [vmem:[%s286 + $0x30] sm:$0xff] %vm1752, %v1669
        %1760 = vst.msk [vmem:[%s286 + $0x38] sm:$0xff] %vm1752, %v1671
        %1761 = vst.msk [vmem:[%s286 + $0x40] sm:$0xff] %vm1752, %v1673
        %1762 = vst.msk [vmem:[%s286 + $0x48] sm:$0xff] %vm1752, %v1675
        %1763 = vst.msk [vmem:[%s286 + $0x50] sm:$0xff] %vm1752, %v1677
        %1764 = vst.msk [vmem:[%s286 + $0x58] sm:$0xff] %vm1752, %v1679
        %1765 = vst.msk [vmem:[%s286 + $0x60] sm:$0xff] %vm1752, %v1681
        %1766 = vst.msk [vmem:[%s286 + $0x68] sm:$0xff] %vm1752, %v1683
        %1767 = vst.msk [vmem:[%s286 + $0x70] sm:$0xff] %vm1752, %v1685
        %1768 = vst.msk [vmem:[%s286 + $0x78] sm:$0xff] %vm1752, %v1687
        %1769 = vst.msk [vmem:[%s286 + $0x80] sm:$0xff] %vm1752, %v1689
        %1770 = vst.msk [vmem:[%s286 + $0x88] sm:$0xff] %vm1752, %v1691
        %1771 = vst.msk [vmem:[%s286 + $0x90] sm:$0xff] %vm1752, %v1693
        %1772 = vst.msk [vmem:[%s286 + $0x98] sm:$0xff] %vm1752, %v1695
        %1773 = vst.msk [vmem:[%s286 + $0xa0] sm:$0xff] %vm1752, %v1697
        %1774 = vst.msk [vmem:[%s286 + $0xa8] sm:$0xff] %vm1752, %v1699
        %1775 = vst.msk [vmem:[%s286 + $0xb0] sm:$0xff] %vm1752, %v1701
        %1776 = vst.msk [vmem:[%s286 + $0xb8] sm:$0xff] %vm1752, %v1703
        %1777 = vst.msk [vmem:[%s286 + $0xc0] sm:$0xff] %vm1752, %v1705
        %1778 = vst.msk [vmem:[%s286 + $0xc8] sm:$0xff] %vm1752, %v1707
        %1779 = vst.msk [vmem:[%s286 + $0xd0] sm:$0xff] %vm1752, %v1709
        %1780 = vst.msk [vmem:[%s286 + $0xd8] sm:$0xff] %vm1752, %v1711
        %1781 = vst.msk [vmem:[%s286 + $0xe0] sm:$0xff] %vm1752, %v1713
        %1782 = vst.msk [vmem:[%s286 + $0xe8] sm:$0xff] %vm1752, %v1715
        %1783 = vst.msk [vmem:[%s286 + $0xf0] sm:$0xff] %vm1752, %v1717
        %1784 = vst.msk [vmem:[%s286 + $0xf8] sm:$0xff] %vm1752, %v1719
        %s1785 = sand.u32 %s186, 1
        %s1786 = scalar_lea.sflag [#allocation4], %s1785
        %s1787 = sand.u32 %s186, 1
        %s1788 = smul.addr %s1787, 256
        %s1789 = scalar_lea.vmem [#allocation3], %s1788
        // Predicated region
        $region49: #{tpu_custom_call.1} parent=47 // pred_check
          %p1790 = pneg %p196
        $region50: #{tpu_custom_call.1} parent=47 // pred_check_branch
          %1792 = sbr.rel (%p1790) target = $region52
        $region51: #{tpu_custom_call.1} parent=47 // pred_region
          %1794 = vsyncadd %s1786, 0
          %s1795 = smul.addr %s21, 32
          %s1796 = smul.addr %s1795, 8
          %s1797 = scalar_lea.hbm %s7, %s1796
          %s1798 = sshll.u32 %s1789, 4
          %s1799 = int_to_ptr.vmem [resolvable:$true] %s1798
          %s1800 = sshll.u32 %s1797, 4
          %s1801 = int_to_ptr.hbm [resolvable:$true] %s1800
          %1806 = dma.vmem_to_hbm [thread:$0]  %s1799, 4096, %s1801, %s1786, 128, 128, 8
        $region52: #{tpu_custom_call.1} parent=47 // pred_fallthru
          _
      $region48: #{tpu_custom_call.1} parent=5 // pred_fallthru
        _
      %p1807 = scmp.le.s32.totalorder 2, %s16
      // Predicated region
      $region53: #{tpu_custom_call.1} parent=5 // pred_check
        %p1808 = pneg %p1807
      $region54: #{tpu_custom_call.1} parent=5 // pred_check_branch
        %1810 = sbr.rel (%p1808) target = $region56
      $region55: #{tpu_custom_call.1} parent=5 // pred_region
        %s1811 = ssub.s32 %s16, 2
        // Predicated region
        $region57: #{tpu_custom_call.1} parent=55 // pred_check
          %p1812 = pneg %p202
        $region58: #{tpu_custom_call.1} parent=55 // pred_check_branch
          %1814 = sbr.rel (%p1812) target = $region60
        $region59: #{tpu_custom_call.1} parent=55 // pred_region
          %s1815 = sand.u32 %s187, 1
          %s1816 = scalar_lea.sflag [#allocation4], %s1815
          %s1817 = sand.u32 %s187, 1
          %s1818 = smul.addr %s1817, 256
          %s1819 = scalar_lea.vmem [#allocation3], %s1818
          %1821 = dma.done %s1816, 4096
        $region60: #{tpu_custom_call.1} parent=55 // pred_fallthru
          _
      $region56: #{tpu_custom_call.1} parent=5 // pred_fallthru
        _
    $region6: #{tpu_custom_call.1} parent=1 // loop_footer
      %s20 = sadd.s32 1, %s16
    $region7: #{tpu_custom_call.1} parent=1 // loop_footer_branch
      %15 = sbr.rel target = $region3
    $region8: #{tpu_custom_call.1} parent=1 // loop_exit
      _
    %1822 = vsyncpa [#allocation4], 1
    %s1823 = scalar_lea.sflag [#allocation4], 1
    %1824 = vsyncpa %s1823, 1

</llo_original>
